<compile_context>
chip_gen: v7x
topology: tpu7x:2x2x1
jax: 0.10.0
libtpu: 0.0.40
codegen_flags: <defaults>
</compile_context>

<pallas_src>
import functools

import numpy as np
import jax
import jax.numpy as jnp
from jax import lax
from jax.experimental import pallas as pl
from jax.experimental.pallas import tpu as pltpu


B_TILE = 8          # batch rows per grid batch-tile (one sublane tile)
LANE = 128          # lane width used for feature padding
DEFAULT_CHUNK = 32  # timesteps processed per grid step


def _round_up(x, m):
    return (x + m - 1) // m * m


def _pad_to(a, shape):
    return jnp.pad(a, [(0, s - d) for d, s in zip(a.shape, shape)])


def _chunk_size(T, chunk):
    return min(chunk, _round_up(T, 8))


# --------------------------------------------------------------------------------------
# Deterministic parameter initialization (synthetic stand-ins for init_utils.*)
# --------------------------------------------------------------------------------------

def sparse_tensor_init(rng: np.random.Generator, M: int, N: int) -> np.ndarray:
    # synthetic dense stand-in for init_utils.sparse_tensor_init
    return rng.uniform(-1.0, 1.0, size=(M, N)).astype(np.float32)


def init_orthogonal_cycle(M: int) -> np.ndarray:
    # cyclic-shift permutation matrix (orthogonal)
    W = np.zeros((M, M), dtype=np.float32)
    W[np.arange(M), (np.arange(M) + 1) % M] = 1.0
    return W


def init_recurrent_kernel(rng: np.random.Generator, M: int, rho: float) -> np.ndarray:
    W = rng.uniform(-1.0, 1.0, size=(M, M)).astype(np.float64)
    sr = float(np.max(np.abs(np.linalg.eigvals(W))))
    return (W * (rho / sr)).astype(np.float32)


def init_bias(rng: np.random.Generator, M: int, bias_scaling: float) -> np.ndarray:
    # stored as (1, M) so it broadcasts across the batch
    return (rng.uniform(-1.0, 1.0, size=(1, M)) * bias_scaling).astype(np.float32)


# --------------------------------------------------------------------------------------
# Pallas kernels (one grid step == CT timesteps; hidden state carried in VMEM scratch)
# --------------------------------------------------------------------------------------

def _memory_chunk_kernel(x_ref, h0_ref, win_ref, wrec_ref, b_ref,
                         h_out_ref, h_carry, *, ct):
    """CT timesteps of the MemoryCell recurrence: h = h @ Wrec + (x @ Win + b)."""
    c = pl.program_id(1)

    @pl.when(c == 0)
    def _():
        h_carry[...] = h0_ref[...]

    # Chunk-level drive GEMM (parallel over time; off the serial chain).
    # Written directly into the output VMEM block; the serial loop updates it in place.
    f_pad = x_ref.shape[2]
    n_pad = win_ref.shape[1]
    flat_x = x_ref[...].reshape(ct * B_TILE, f_pad)
    drive = jnp.dot(flat_x, win_ref[...], preferred_element_type=jnp.float32) + b_ref[...]
    h_out_ref[...] = drive.reshape(ct, B_TILE, n_pad)

    wrec = wrec_ref[...]

    def step(tt, h):
        h_new = jnp.dot(h, wrec, preferred_element_type=jnp.float32) + h_out_ref[tt]
        h_out_ref[tt] = h_new          # full (8, n_pad) unmasked tile store
        return h_new

    h_carry[...] = lax.fori_loop(0, ct, step, h_carry[...], unroll=True)


def _reservoir_chunk_kernel(x_ref, m_ref, h0_ref, win_ref, wmem_ref, whh_ref, b_ref,
                            h_out_ref, h_carry, *, ct, n_pad, alpha, beta):
    """CT timesteps of the ReservoirCell recurrence (act = tanh, residual via [Wrec|O])."""
    c = pl.program_id(1)

    @pl.when(c == 0)
    def _():
        h_carry[...] = h0_ref[...]

    # Chunk-level drive GEMM: x@Win + m@Wmem + bias (off the serial chain).
    flat_x = x_ref[...].reshape(ct * B_TILE, x_ref.shape[2])
    flat_m = m_ref[...].reshape(ct * B_TILE, m_ref.shape[2])
    drive = (jnp.dot(flat_x, win_ref[...], preferred_element_type=jnp.float32)
             + jnp.dot(flat_m, wmem_ref[...], preferred_element_type=jnp.float32)
             + b_ref[...])
    h_out_ref[...] = drive.reshape(ct, B_TILE, n_pad)

    whh = whh_ref[...]                 # (n_pad, 2*n_pad) == [Wrec | O]

    def step(tt, h):
        z = jnp.dot(h, whh, preferred_element_type=jnp.float32)     # one MXU push / step
        h_new = alpha * z[:, n_pad:] + beta * jnp.tanh(z[:, :n_pad] + h_out_ref[tt])
        h_out_ref[tt] = h_new
        return h_new

    h_carry[...] = lax.fori_loop(0, ct, step, h_carry[...], unroll=True)


def _deep_chunk_kernel(x_ref, h0m_ref, h0r_ref,
                       mwin_ref, mwrec_ref, mb_ref,
                       rwin_ref, rwmem_ref, rwhh_ref, rb_ref,
                       m_out_ref, h_out_ref,
                       hm_carry, hr_carry,
                       *, ct, n_pad, alpha, beta):
    """Fused MemoryCell + ReservoirCell: m stays in VMEM for the reservoir drive GEMM."""
    c = pl.program_id(1)

    @pl.when(c == 0)
    def _():
        hm_carry[...] = h0m_ref[...]
        hr_carry[...] = h0r_ref[...]

    flat_x = x_ref[...].reshape(ct * B_TILE, x_ref.shape[2])
    nm_pad = mwin_ref.shape[1]

    # ---- memory reservoir (linear); drive goes straight into m_out_ref ----
    mdrive = jnp.dot(flat_x, mwin_ref[...], preferred_element_type=jnp.float32) + mb_ref[...]
    m_out_ref[...] = mdrive.reshape(ct, B_TILE, nm_pad)
    mwrec = mwrec_ref[...]

    def mem_step(tt, h):
        h_new = jnp.dot(h, mwrec, preferred_element_type=jnp.float32) + m_out_ref[tt]
        m_out_ref[tt] = h_new
        return h_new

    hm_carry[...] = lax.fori_loop(0, ct, mem_step, hm_carry[...], unroll=True)

    # ---- non-linear (residual) reservoir, driven by x and the in-VMEM m ----
    flat_m = m_out_ref[...].reshape(ct * B_TILE, nm_pad)
    rdrive = (jnp.dot(flat_x, rwin_ref[...], preferred_element_type=jnp.float32)
              + jnp.dot(flat_m, rwmem_ref[...], preferred_element_type=jnp.float32)
              + rb_ref[...])
    h_out_ref[...] = rdrive.reshape(ct, B_TILE, n_pad)
    whh = rwhh_ref[...]

    def res_step(tt, h):
        z = jnp.dot(h, whh, preferred_element_type=jnp.float32)
        h_new = alpha * z[:, n_pad:] + beta * jnp.tanh(z[:, :n_pad] + h_out_ref[tt])
        h_out_ref[tt] = h_new
        return h_new

    hr_carry[...] = lax.fori_loop(0, ct, res_step, hr_carry[...], unroll=True)


# --------------------------------------------------------------------------------------
# Wrappers (Reservoir.forward)
# --------------------------------------------------------------------------------------

def _prep_seq(x, t_pad, b_pad, f_pad):
    """(B, T, F) -> zero-padded, time-major (T_pad, B_pad, F_pad) float32."""
    x_t = jnp.transpose(x.astype(jnp.float32), (1, 0, 2))
    return _pad_to(x_t, (t_pad, b_pad, f_pad))


def _prep_h0(h_prev, b_pad, n_pad):
    if h_prev is None:
        return jnp.zeros((b_pad, n_pad), jnp.float32)
    return _pad_to(h_prev.astype(jnp.float32), (b_pad, n_pad))


def memory_reservoir_forward(x, win, wrec, bias, h_prev=None, *, chunk=DEFAULT_CHUNK):
    """Reservoir(MemoryCell).forward: x (B,T,in) -> (h (B,T,N), h_last (B,N))."""
    B, T, F = x.shape
    N = win.shape[1]
    ct = _chunk_size(T, chunk)
    t_pad, b_pad = _round_up(T, ct), _round_up(B, B_TILE)
    f_pad, n_pad = _round_up(F, LANE), _round_up(N, LANE)

    x_p = _prep_seq(x, t_pad, b_pad, f_pad)
    h0 = _prep_h0(h_prev, b_pad, n_pad)
    win_p = _pad_to(win.astype(jnp.float32), (f_pad, n_pad))
    wrec_p = _pad_to(wrec.astype(jnp.float32), (n_pad, n_pad))
    bias_p = _pad_to(bias.astype(jnp.float32).reshape(1, -1), (1, n_pad))

    kernel = functools.partial(_memory_chunk_kernel, ct=ct)
    h_seq = pl.pallas_call(
        kernel,
        out_shape=jax.ShapeDtypeStruct((t_pad, b_pad, n_pad), jnp.float32),
        grid_spec=pltpu.PrefetchScalarGridSpec(
            num_scalar_prefetch=0,
            grid=(b_pad // B_TILE, t_pad // ct),
            in_specs=[
                pl.BlockSpec((ct, B_TILE, f_pad), lambda b, c: (c, b, 0)),
                pl.BlockSpec((B_TILE, n_pad), lambda b, c: (b, 0)),
                pl.BlockSpec((f_pad, n_pad), lambda b, c: (0, 0)),
                pl.BlockSpec((n_pad, n_pad), lambda b, c: (0, 0)),
                pl.BlockSpec((1, n_pad), lambda b, c: (0, 0)),
            ],
            out_specs=pl.BlockSpec((ct, B_TILE, n_pad), lambda b, c: (c, b, 0)),
            scratch_shapes=[
                pltpu.VMEM((B_TILE, n_pad), jnp.float32),         # h carry across chunks
            ],
        ),
        compiler_params=pltpu.CompilerParams(
            dimension_semantics=("parallel", "arbitrary")),
    )(x_p, h0, win_p, wrec_p, bias_p)

    h = jnp.transpose(h_seq[:T, :B, :N], (1, 0, 2))
    return h, h[:, -1, :]


def reservoir_cell_forward(x, m, win, wmem, wrec, O, bias, alpha, beta,
                           h_prev=None, *, chunk=DEFAULT_CHUNK):
    """Reservoir(ReservoirCell).forward: x (B,T,in), m (B,T,mem) -> (h, h_last)."""
    B, T, F = x.shape
    Fm = m.shape[2]
    N = win.shape[1]
    ct = _chunk_size(T, chunk)
    t_pad, b_pad = _round_up(T, ct), _round_up(B, B_TILE)
    f_pad, fm_pad, n_pad = _round_up(F, LANE), _round_up(Fm, LANE), _round_up(N, LANE)

    x_p = _prep_seq(x, t_pad, b_pad, f_pad)
    m_p = _prep_seq(m, t_pad, b_pad, fm_pad)
    h0 = _prep_h0(h_prev, b_pad, n_pad)
    win_p = _pad_to(win.astype(jnp.float32), (f_pad, n_pad))
    wmem_p = _pad_to(wmem.astype(jnp.float32), (fm_pad, n_pad))
    # Residual kernel O stacked next to Wrec -> single matmul per serial step.
    whh_p = jnp.concatenate(
        [_pad_to(wrec.astype(jnp.float32), (n_pad, n_pad)),
         _pad_to(O.astype(jnp.float32), (n_pad, n_pad))], axis=1)
    bias_p = _pad_to(bias.astype(jnp.float32).reshape(1, -1), (1, n_pad))

    # TODO(synk): for very large n_units (>= ~2048) on v7x (64 MiB VMEM), tile the
    # h @ [Wrec|O] matmul over the output dim / stream weight tiles via manual DMA
    # instead of holding the full double-buffered weight block resident.
    kernel = functools.partial(_reservoir_chunk_kernel, ct=ct, n_pad=n_pad,
                               alpha=float(alpha), beta=float(beta))
    h_seq = pl.pallas_call(
        kernel,
        out_shape=jax.ShapeDtypeStruct((t_pad, b_pad, n_pad), jnp.float32),
        grid_spec=pltpu.PrefetchScalarGridSpec(
            num_scalar_prefetch=0,
            grid=(b_pad // B_TILE, t_pad // ct),
            in_specs=[
                pl.BlockSpec((ct, B_TILE, f_pad), lambda b, c: (c, b, 0)),
                pl.BlockSpec((ct, B_TILE, fm_pad), lambda b, c: (c, b, 0)),
                pl.BlockSpec((B_TILE, n_pad), lambda b, c: (b, 0)),
                pl.BlockSpec((f_pad, n_pad), lambda b, c: (0, 0)),
                pl.BlockSpec((fm_pad, n_pad), lambda b, c: (0, 0)),
                pl.BlockSpec((n_pad, 2 * n_pad), lambda b, c: (0, 0)),
                pl.BlockSpec((1, n_pad), lambda b, c: (0, 0)),
            ],
            out_specs=pl.BlockSpec((ct, B_TILE, n_pad), lambda b, c: (c, b, 0)),
            scratch_shapes=[
                pltpu.VMEM((B_TILE, n_pad), jnp.float32),         # h carry across chunks
            ],
        ),
        compiler_params=pltpu.CompilerParams(
            dimension_semantics=("parallel", "arbitrary")),
    )(x_p, m_p, h0, win_p, wmem_p, whh_p, bias_p)

    h = jnp.transpose(h_seq[:T, :B, :N], (1, 0, 2))
    return h, h[:, -1, :]


def deep_reservoir_forward(x, mem_win, mem_wrec, mem_bias,
                           res_win, res_wmem, res_wrec, res_O, res_bias,
                           alpha, beta, *, chunk=DEFAULT_CHUNK):
    """Fused Reservoir(MemoryCell) -> Reservoir(ReservoirCell) in one pallas_call."""
    B, T, F = x.shape
    Nm, N = mem_win.shape[1], res_win.shape[1]
    ct = _chunk_size(T, chunk)
    t_pad, b_pad = _round_up(T, ct), _round_up(B, B_TILE)
    f_pad, nm_pad, n_pad = _round_up(F, LANE), _round_up(Nm, LANE), _round_up(N, LANE)

    x_p = _prep_seq(x, t_pad, b_pad, f_pad)
    h0m = jnp.zeros((b_pad, nm_pad), jnp.float32)
    h0r = jnp.zeros((b_pad, n_pad), jnp.float32)
    mwin_p = _pad_to(mem_win.astype(jnp.float32), (f_pad, nm_pad))
    mwrec_p = _pad_to(mem_wrec.astype(jnp.float32), (nm_pad, nm_pad))
    mb_p = _pad_to(mem_bias.astype(jnp.float32).reshape(1, -1), (1, nm_pad))
    rwin_p = _pad_to(res_win.astype(jnp.float32), (f_pad, n_pad))
    rwmem_p = _pad_to(res_wmem.astype(jnp.float32), (nm_pad, n_pad))
    rwhh_p = jnp.concatenate(
        [_pad_to(res_wrec.astype(jnp.float32), (n_pad, n_pad)),
         _pad_to(res_O.astype(jnp.float32), (n_pad, n_pad))], axis=1)
    rb_p = _pad_to(res_bias.astype(jnp.float32).reshape(1, -1), (1, n_pad))

    kernel = functools.partial(_deep_chunk_kernel, ct=ct, n_pad=n_pad,
                               alpha=float(alpha), beta=float(beta))
    m_seq, h_seq = pl.pallas_call(
        kernel,
        out_shape=(jax.ShapeDtypeStruct((t_pad, b_pad, nm_pad), jnp.float32),
                   jax.ShapeDtypeStruct((t_pad, b_pad, n_pad), jnp.float32)),
        grid_spec=pltpu.PrefetchScalarGridSpec(
            num_scalar_prefetch=0,
            grid=(b_pad // B_TILE, t_pad // ct),
            in_specs=[
                pl.BlockSpec((ct, B_TILE, f_pad), lambda b, c: (c, b, 0)),
                pl.BlockSpec((B_TILE, nm_pad), lambda b, c: (b, 0)),
                pl.BlockSpec((B_TILE, n_pad), lambda b, c: (b, 0)),
                pl.BlockSpec((f_pad, nm_pad), lambda b, c: (0, 0)),
                pl.BlockSpec((nm_pad, nm_pad), lambda b, c: (0, 0)),
                pl.BlockSpec((1, nm_pad), lambda b, c: (0, 0)),
                pl.BlockSpec((f_pad, n_pad), lambda b, c: (0, 0)),
                pl.BlockSpec((nm_pad, n_pad), lambda b, c: (0, 0)),
                pl.BlockSpec((n_pad, 2 * n_pad), lambda b, c: (0, 0)),
                pl.BlockSpec((1, n_pad), lambda b, c: (0, 0)),
            ],
            out_specs=[
                pl.BlockSpec((ct, B_TILE, nm_pad), lambda b, c: (c, b, 0)),
                pl.BlockSpec((ct, B_TILE, n_pad), lambda b, c: (c, b, 0)),
            ],
            scratch_shapes=[
                pltpu.VMEM((B_TILE, nm_pad), jnp.float32),        # memory h carry
                pltpu.VMEM((B_TILE, n_pad), jnp.float32),         # reservoir h carry
            ],
        ),
        compiler_params=pltpu.CompilerParams(
            dimension_semantics=("parallel", "arbitrary")),
    )(x_p, h0m, h0r, mwin_p, mwrec_p, mb_p, rwin_p, rwmem_p, rwhh_p, rb_p)

    m = jnp.transpose(m_seq[:T, :B, :Nm], (1, 0, 2))
    h = jnp.transpose(h_seq[:T, :B, :N], (1, 0, 2))
    return m, m[:, -1, :], h, h[:, -1, :]


# --------------------------------------------------------------------------------------
# Pure-JAX references (for correctness checking)
# --------------------------------------------------------------------------------------

def memory_reservoir_ref(x, win, wrec, bias):
    B, T, _ = x.shape
    h = jnp.zeros((B, win.shape[1]), jnp.float32)
    hs = []
    for t in range(T):
        h = x[:, t] @ win + h @ wrec + bias
        hs.append(h)
    h_all = jnp.stack(hs, axis=1)
    return h_all, h_all[:, -1, :]


def reservoir_cell_ref(x, m, win, wmem, wrec, O, bias, alpha, beta):
    B, T, _ = x.shape
    h = jnp.zeros((B, win.shape[1]), jnp.float32)
    hs = []
    for t in range(T):
        h = alpha * (h @ O) + beta * jnp.tanh(h @ wrec + m[:, t] @ wmem + x[:, t] @ win + bias)
        hs.append(h)
    h_all = jnp.stack(hs, axis=1)
    return h_all, h_all[:, -1, :]


# --------------------------------------------------------------------------------------
# Main
# --------------------------------------------------------------------------------------

if __name__ == "__main__":
    # x: (B, T, in_size), m: (B, T, memory_size)
    B, T = 4, 12
    in_size = 8
    memory_units = 16   # n_units of MemoryCell == memory_size of ReservoirCell
    n_units = 32
    chunk = 8           # 2 time chunks -> exercises the cross-chunk hidden-state carry

    in_scaling, memory_scaling, bias_scaling = 1.0, 0.5, 0.1
    rho, alpha, beta = 0.9, 0.5, 0.5

    nprng = np.random.default_rng(0)

    # MemoryCell parameters
    mem_win = jnp.asarray(sparse_tensor_init(nprng, in_size, memory_units) * in_scaling)
    mem_wrec = jnp.asarray(init_orthogonal_cycle(memory_units))
    mem_bias = jnp.asarray(init_bias(nprng, memory_units, bias_scaling))

    # ReservoirCell parameters (act = tanh)
    res_win = jnp.asarray(sparse_tensor_init(nprng, in_size, n_units) * in_scaling)
    res_wmem = jnp.asarray(sparse_tensor_init(nprng, memory_units, n_units) * memory_scaling)
    res_wrec = jnp.asarray(init_recurrent_kernel(nprng, n_units, rho))
    res_O = jnp.zeros((n_units, n_units), jnp.float32)
    res_bias = jnp.asarray(init_bias(nprng, n_units, bias_scaling))

    # Inputs
    key = jax.random.PRNGKey(0)
    x = jax.random.normal(key, (B, T, in_size), dtype=jnp.float32)

    # ---- Standalone module path: Reservoir(MemoryCell) then Reservoir(ReservoirCell) ----
    m_all, m_last = memory_reservoir_forward(x, mem_win, mem_wrec, mem_bias, chunk=chunk)
    m_all = jax.block_until_ready(m_all)

    h_all, h_last = reservoir_cell_forward(
        x, m_all, res_win, res_wmem, res_wrec, res_O, res_bias, alpha, beta, chunk=chunk)
    h_all = jax.block_until_ready(h_all)
    h_last = jax.block_until_ready(h_last)

    # ---- Fused path: both cells in a single pallas_call (m stays in VMEM) ----
    fm_all, fm_last, fh_all, fh_last = deep_reservoir_forward(
        x, mem_win, mem_wrec, mem_bias,
        res_win, res_wmem, res_wrec, res_O, res_bias, alpha, beta, chunk=chunk)
    fh_all = jax.block_until_ready(fh_all)

    # ---- Correctness checks against pure-JAX references ----
    m_ref, m_last_ref = memory_reservoir_ref(x, mem_win, mem_wrec, mem_bias)
    h_ref, h_last_ref = reservoir_cell_ref(
        x, m_ref, res_win, res_wmem, res_wrec, res_O, res_bias, alpha, beta)

    assert m_all.shape == (B, T, memory_units) and m_last.shape == (B, memory_units)
    assert h_all.shape == (B, T, n_units) and h_last.shape == (B, n_units)
    np.testing.assert_allclose(np.asarray(m_all), np.asarray(m_ref), rtol=1e-4, atol=1e-4)
    np.testing.assert_allclose(np.asarray(h_all), np.asarray(h_ref), rtol=1e-4, atol=1e-4)
    np.testing.assert_allclose(np.asarray(h_last), np.asarray(h_last_ref), rtol=1e-4, atol=1e-4)
    np.testing.assert_allclose(np.asarray(fm_all), np.asarray(m_ref), rtol=1e-4, atol=1e-4)
    np.testing.assert_allclose(np.asarray(fh_all), np.asarray(h_ref), rtol=1e-4, atol=1e-4)
    np.testing.assert_allclose(np.asarray(fh_last), np.asarray(h_last_ref), rtol=1e-4, atol=1e-4)

    print("KERNEL_OK")
</pallas_src>

<mosaic_0001>
module attributes {stable_mosaic.version = 11 : i64} {
  func.func @_memory_chunk_kernel(%arg0: i32, %arg1: i32, %arg2: memref<8x8x128xf32, #tpu.memory_space<vmem>>, %arg3: memref<8x128xf32, #tpu.memory_space<vmem>>, %arg4: memref<128x128xf32, #tpu.memory_space<vmem>>, %arg5: memref<128x128xf32, #tpu.memory_space<vmem>>, %arg6: memref<1x128xf32, #tpu.memory_space<vmem>>, %arg7: memref<8x8x128xf32, #tpu.memory_space<vmem>>, %arg8: memref<8x128xf32, #tpu.memory_space<vmem>>) attributes {dimension_semantics = [#tpu.dimension_semantics<parallel>, #tpu.dimension_semantics<arbitrary>], iteration_bounds = array<i64: 1, 2>, scalar_prefetch = 0 : i64, scratch_operands = 1 : i64, tpu.core_type = #tpu.core_type<tc>, window_params = [{transform_indices = @transform_0, window_bounds = array<i64: 8, 8, 128>}, {transform_indices = @transform_1, window_bounds = array<i64: 8, 128>}, {pipeline_mode = #tpu.pipeline_mode<synchronous>, transform_indices = @transform_2, window_bounds = array<i64: 128, 128>}, {pipeline_mode = #tpu.pipeline_mode<synchronous>, transform_indices = @transform_3, window_bounds = array<i64: 128, 128>}, {pipeline_mode = #tpu.pipeline_mode<synchronous>, transform_indices = @transform_4, window_bounds = array<i64: 1, 128>}, {transform_indices = @transform_5, window_bounds = array<i64: 8, 8, 128>}]} {
    %c0_i32 = arith.constant 0 : i32
    %0 = arith.cmpi eq, %arg1, %c0_i32 : i32
    %1 = arith.extui %0 : i1 to i32
    %c0_i32_0 = arith.constant 0 : i32
    %2 = arith.cmpi ne, %1, %c0_i32_0 : i32
    scf.if %2 {
      %c0_57 = arith.constant 0 : index
      %c0_58 = arith.constant 0 : index
      %87 = vector.load %arg3[%c0_57, %c0_58] : memref<8x128xf32, #tpu.memory_space<vmem>>, vector<8x128xf32>
      %c0_59 = arith.constant 0 : index
      %c0_60 = arith.constant 0 : index
      %88 = vector.load %arg8[%c0_59, %c0_60] : memref<8x128xf32, #tpu.memory_space<vmem>>, vector<8x128xf32>
      tpu.vector_store %arg8[%c0_59, %c0_60], %87 {strides = array<i32>} : memref<8x128xf32, #tpu.memory_space<vmem>>, vector<8x128xf32>,
    } else {
    }
    %c0 = arith.constant 0 : index
    %c0_1 = arith.constant 0 : index
    %c0_2 = arith.constant 0 : index
    %3 = vector.load %arg2[%c0, %c0_1, %c0_2] : memref<8x8x128xf32, #tpu.memory_space<vmem>>, vector<8x8x128xf32>
    %4 = vector.shape_cast %3 : vector<8x8x128xf32> to vector<64x128xf32>
    %c0_3 = arith.constant 0 : index
    %c0_4 = arith.constant 0 : index
    %5 = vector.load %arg4[%c0_3, %c0_4] : memref<128x128xf32, #tpu.memory_space<vmem>>, vector<128x128xf32>
    %cst = arith.constant dense<0.000000e+00> : vector<64x128xf32>
    %6 = tpu.matmul %4, %5, %cst {dimension_numbers = #tpu.dot_dimension_numbers<[1], [0], [0], [1], [0, 0, 1, 1], [], []>} : vector<64x128xf32>, vector<128x128xf32>, vector<64x128xf32> -> vector<64x128xf32>
    %c0_5 = arith.constant 0 : index
    %c0_6 = arith.constant 0 : index
    %7 = vector.load %arg6[%c0_5, %c0_6] : memref<1x128xf32, #tpu.memory_space<vmem>>, vector<1x128xf32>
    %8 = vector.broadcast %7 : vector<1x128xf32> to vector<64x128xf32>
    %9 = arith.addf %6, %8 : vector<64x128xf32>
    %10 = vector.shape_cast %9 : vector<64x128xf32> to vector<8x8x128xf32>
    %c0_7 = arith.constant 0 : index
    %c0_8 = arith.constant 0 : index
    %c0_9 = arith.constant 0 : index
    %11 = vector.load %arg7[%c0_7, %c0_8, %c0_9] : memref<8x8x128xf32, #tpu.memory_space<vmem>>, vector<8x8x128xf32>
    tpu.vector_store %arg7[%c0_7, %c0_8, %c0_9], %10 {strides = array<i32>} : memref<8x8x128xf32, #tpu.memory_space<vmem>>, vector<8x8x128xf32>,
    %c0_10 = arith.constant 0 : index
    %c0_11 = arith.constant 0 : index
    %12 = vector.load %arg5[%c0_10, %c0_11] : memref<128x128xf32, #tpu.memory_space<vmem>>, vector<128x128xf32>
    %c0_12 = arith.constant 0 : index
    %c0_13 = arith.constant 0 : index
    %13 = vector.load %arg8[%c0_12, %c0_13] : memref<8x128xf32, #tpu.memory_space<vmem>>, vector<8x128xf32>
    %c0_i32_14 = arith.constant 0 : i32
    %cst_15 = arith.constant dense<0.000000e+00> : vector<8x128xf32>
    %14 = tpu.matmul %13, %12, %cst_15 {dimension_numbers = #tpu.dot_dimension_numbers<[1], [0], [0], [1], [0, 0, 1, 1], [], []>} : vector<8x128xf32>, vector<128x128xf32>, vector<8x128xf32> -> vector<8x128xf32>
    %15 = arith.index_cast %c0_i32_14 : i32 to index
    %c0_16 = arith.constant 0 : index
    %c0_17 = arith.constant 0 : index
    %16 = vector.load %arg7[%15, %c0_16, %c0_17] : memref<8x8x128xf32, #tpu.memory_space<vmem>>, vector<1x8x128xf32>
    %17 = vector.shape_cast %16 : vector<1x8x128xf32> to vector<8x128xf32>
    %18 = arith.addf %14, %17 : vector<8x128xf32>
    %19 = arith.index_cast %c0_i32_14 : i32 to index
    %c0_18 = arith.constant 0 : index
    %c0_19 = arith.constant 0 : index
    %20 = vector.load %arg7[%19, %c0_18, %c0_19] : memref<8x8x128xf32, #tpu.memory_space<vmem>>, vector<1x8x128xf32>
    %21 = vector.shape_cast %20 : vector<1x8x128xf32> to vector<8x128xf32>
    %22 = vector.shape_cast %18 : vector<8x128xf32> to vector<1x8x128xf32>
    tpu.vector_store %arg7[%19, %c0_18, %c0_19], %22 {strides = array<i32>} : memref<8x8x128xf32, #tpu.memory_space<vmem>>, vector<1x8x128xf32>,
    %c1_i32 = arith.constant 1 : i32
    %cst_20 = arith.constant dense<0.000000e+00> : vector<8x128xf32>
    %23 = tpu.matmul %18, %12, %cst_20 {dimension_numbers = #tpu.dot_dimension_numbers<[1], [0], [0], [1], [0, 0, 1, 1], [], []>} : vector<8x128xf32>, vector<128x128xf32>, vector<8x128xf32> -> vector<8x128xf32>
    %24 = arith.index_cast %c1_i32 : i32 to index
    %c0_21 = arith.constant 0 : index
    %c0_22 = arith.constant 0 : index
    %25 = vector.load %arg7[%24, %c0_21, %c0_22] : memref<8x8x128xf32, #tpu.memory_space<vmem>>, vector<1x8x128xf32>
    %26 = vector.shape_cast %25 : vector<1x8x128xf32> to vector<8x128xf32>
    %27 = arith.addf %23, %26 : vector<8x128xf32>
    %28 = arith.index_cast %c1_i32 : i32 to index
    %c0_23 = arith.constant 0 : index
    %c0_24 = arith.constant 0 : index
    %29 = vector.load %arg7[%28, %c0_23, %c0_24] : memref<8x8x128xf32, #tpu.memory_space<vmem>>, vector<1x8x128xf32>
    %30 = vector.shape_cast %29 : vector<1x8x128xf32> to vector<8x128xf32>
    %31 = vector.shape_cast %27 : vector<8x128xf32> to vector<1x8x128xf32>
    tpu.vector_store %arg7[%28, %c0_23, %c0_24], %31 {strides = array<i32>} : memref<8x8x128xf32, #tpu.memory_space<vmem>>, vector<1x8x128xf32>,
    %c2_i32 = arith.constant 2 : i32
    %cst_25 = arith.constant dense<0.000000e+00> : vector<8x128xf32>
    %32 = tpu.matmul %27, %12, %cst_25 {dimension_numbers = #tpu.dot_dimension_numbers<[1], [0], [0], [1], [0, 0, 1, 1], [], []>} : vector<8x128xf32>, vector<128x128xf32>, vector<8x128xf32> -> vector<8x128xf32>
    %33 = arith.index_cast %c2_i32 : i32 to index
    %c0_26 = arith.constant 0 : index
    %c0_27 = arith.constant 0 : index
    %34 = vector.load %arg7[%33, %c0_26, %c0_27] : memref<8x8x128xf32, #tpu.memory_space<vmem>>, vector<1x8x128xf32>
    %35 = vector.shape_cast %34 : vector<1x8x128xf32> to vector<8x128xf32>
    %36 = arith.addf %32, %35 : vector<8x128xf32>
    %37 = arith.index_cast %c2_i32 : i32 to index
    %c0_28 = arith.constant 0 : index
    %c0_29 = arith.constant 0 : index
    %38 = vector.load %arg7[%37, %c0_28, %c0_29] : memref<8x8x128xf32, #tpu.memory_space<vmem>>, vector<1x8x128xf32>
    %39 = vector.shape_cast %38 : vector<1x8x128xf32> to vector<8x128xf32>
    %40 = vector.shape_cast %36 : vector<8x128xf32> to vector<1x8x128xf32>
    tpu.vector_store %arg7[%37, %c0_28, %c0_29], %40 {strides = array<i32>} : memref<8x8x128xf32, #tpu.memory_space<vmem>>, vector<1x8x128xf32>,
    %c3_i32 = arith.constant 3 : i32
    %cst_30 = arith.constant dense<0.000000e+00> : vector<8x128xf32>
    %41 = tpu.matmul %36, %12, %cst_30 {dimension_numbers = #tpu.dot_dimension_numbers<[1], [0], [0], [1], [0, 0, 1, 1], [], []>} : vector<8x128xf32>, vector<128x128xf32>, vector<8x128xf32> -> vector<8x128xf32>
    %42 = arith.index_cast %c3_i32 : i32 to index
    %c0_31 = arith.constant 0 : index
    %c0_32 = arith.constant 0 : index
    %43 = vector.load %arg7[%42, %c0_31, %c0_32] : memref<8x8x128xf32, #tpu.memory_space<vmem>>, vector<1x8x128xf32>
    %44 = vector.shape_cast %43 : vector<1x8x128xf32> to vector<8x128xf32>
    %45 = arith.addf %41, %44 : vector<8x128xf32>
    %46 = arith.index_cast %c3_i32 : i32 to index
    %c0_33 = arith.constant 0 : index
    %c0_34 = arith.constant 0 : index
    %47 = vector.load %arg7[%46, %c0_33, %c0_34] : memref<8x8x128xf32, #tpu.memory_space<vmem>>, vector<1x8x128xf32>
    %48 = vector.shape_cast %47 : vector<1x8x128xf32> to vector<8x128xf32>
    %49 = vector.shape_cast %45 : vector<8x128xf32> to vector<1x8x128xf32>
    tpu.vector_store %arg7[%46, %c0_33, %c0_34], %49 {strides = array<i32>} : memref<8x8x128xf32, #tpu.memory_space<vmem>>, vector<1x8x128xf32>,
    %c4_i32 = arith.constant 4 : i32
    %cst_35 = arith.constant dense<0.000000e+00> : vector<8x128xf32>
    %50 = tpu.matmul %45, %12, %cst_35 {dimension_numbers = #tpu.dot_dimension_numbers<[1], [0], [0], [1], [0, 0, 1, 1], [], []>} : vector<8x128xf32>, vector<128x128xf32>, vector<8x128xf32> -> vector<8x128xf32>
    %51 = arith.index_cast %c4_i32 : i32 to index
    %c0_36 = arith.constant 0 : index
    %c0_37 = arith.constant 0 : index
    %52 = vector.load %arg7[%51, %c0_36, %c0_37] : memref<8x8x128xf32, #tpu.memory_space<vmem>>, vector<1x8x128xf32>
    %53 = vector.shape_cast %52 : vector<1x8x128xf32> to vector<8x128xf32>
    %54 = arith.addf %50, %53 : vector<8x128xf32>
    %55 = arith.index_cast %c4_i32 : i32 to index
    %c0_38 = arith.constant 0 : index
    %c0_39 = arith.constant 0 : index
    %56 = vector.load %arg7[%55, %c0_38, %c0_39] : memref<8x8x128xf32, #tpu.memory_space<vmem>>, vector<1x8x128xf32>
    %57 = vector.shape_cast %56 : vector<1x8x128xf32> to vector<8x128xf32>
    %58 = vector.shape_cast %54 : vector<8x128xf32> to vector<1x8x128xf32>
    tpu.vector_store %arg7[%55, %c0_38, %c0_39], %58 {strides = array<i32>} : memref<8x8x128xf32, #tpu.memory_space<vmem>>, vector<1x8x128xf32>,
    %c5_i32 = arith.constant 5 : i32
    %cst_40 = arith.constant dense<0.000000e+00> : vector<8x128xf32>
    %59 = tpu.matmul %54, %12, %cst_40 {dimension_numbers = #tpu.dot_dimension_numbers<[1], [0], [0], [1], [0, 0, 1, 1], [], []>} : vector<8x128xf32>, vector<128x128xf32>, vector<8x128xf32> -> vector<8x128xf32>
    %60 = arith.index_cast %c5_i32 : i32 to index
    %c0_41 = arith.constant 0 : index
    %c0_42 = arith.constant 0 : index
    %61 = vector.load %arg7[%60, %c0_41, %c0_42] : memref<8x8x128xf32, #tpu.memory_space<vmem>>, vector<1x8x128xf32>
    %62 = vector.shape_cast %61 : vector<1x8x128xf32> to vector<8x128xf32>
    %63 = arith.addf %59, %62 : vector<8x128xf32>
    %64 = arith.index_cast %c5_i32 : i32 to index
    %c0_43 = arith.constant 0 : index
    %c0_44 = arith.constant 0 : index
    %65 = vector.load %arg7[%64, %c0_43, %c0_44] : memref<8x8x128xf32, #tpu.memory_space<vmem>>, vector<1x8x128xf32>
    %66 = vector.shape_cast %65 : vector<1x8x128xf32> to vector<8x128xf32>
    %67 = vector.shape_cast %63 : vector<8x128xf32> to vector<1x8x128xf32>
    tpu.vector_store %arg7[%64, %c0_43, %c0_44], %67 {strides = array<i32>} : memref<8x8x128xf32, #tpu.memory_space<vmem>>, vector<1x8x128xf32>,
    %c6_i32 = arith.constant 6 : i32
    %cst_45 = arith.constant dense<0.000000e+00> : vector<8x128xf32>
    %68 = tpu.matmul %63, %12, %cst_45 {dimension_numbers = #tpu.dot_dimension_numbers<[1], [0], [0], [1], [0, 0, 1, 1], [], []>} : vector<8x128xf32>, vector<128x128xf32>, vector<8x128xf32> -> vector<8x128xf32>
    %69 = arith.index_cast %c6_i32 : i32 to index
    %c0_46 = arith.constant 0 : index
    %c0_47 = arith.constant 0 : index
    %70 = vector.load %arg7[%69, %c0_46, %c0_47] : memref<8x8x128xf32, #tpu.memory_space<vmem>>, vector<1x8x128xf32>
    %71 = vector.shape_cast %70 : vector<1x8x128xf32> to vector<8x128xf32>
    %72 = arith.addf %68, %71 : vector<8x128xf32>
    %73 = arith.index_cast %c6_i32 : i32 to index
    %c0_48 = arith.constant 0 : index
    %c0_49 = arith.constant 0 : index
    %74 = vector.load %arg7[%73, %c0_48, %c0_49] : memref<8x8x128xf32, #tpu.memory_space<vmem>>, vector<1x8x128xf32>
    %75 = vector.shape_cast %74 : vector<1x8x128xf32> to vector<8x128xf32>
    %76 = vector.shape_cast %72 : vector<8x128xf32> to vector<1x8x128xf32>
    tpu.vector_store %arg7[%73, %c0_48, %c0_49], %76 {strides = array<i32>} : memref<8x8x128xf32, #tpu.memory_space<vmem>>, vector<1x8x128xf32>,
    %c7_i32 = arith.constant 7 : i32
    %cst_50 = arith.constant dense<0.000000e+00> : vector<8x128xf32>
    %77 = tpu.matmul %72, %12, %cst_50 {dimension_numbers = #tpu.dot_dimension_numbers<[1], [0], [0], [1], [0, 0, 1, 1], [], []>} : vector<8x128xf32>, vector<128x128xf32>, vector<8x128xf32> -> vector<8x128xf32>
    %78 = arith.index_cast %c7_i32 : i32 to index
    %c0_51 = arith.constant 0 : index
    %c0_52 = arith.constant 0 : index
    %79 = vector.load %arg7[%78, %c0_51, %c0_52] : memref<8x8x128xf32, #tpu.memory_space<vmem>>, vector<1x8x128xf32>
    %80 = vector.shape_cast %79 : vector<1x8x128xf32> to vector<8x128xf32>
    %81 = arith.addf %77, %80 : vector<8x128xf32>
    %82 = arith.index_cast %c7_i32 : i32 to index
    %c0_53 = arith.constant 0 : index
    %c0_54 = arith.constant 0 : index
    %83 = vector.load %arg7[%82, %c0_53, %c0_54] : memref<8x8x128xf32, #tpu.memory_space<vmem>>, vector<1x8x128xf32>
    %84 = vector.shape_cast %83 : vector<1x8x128xf32> to vector<8x128xf32>
    %85 = vector.shape_cast %81 : vector<8x128xf32> to vector<1x8x128xf32>
    tpu.vector_store %arg7[%82, %c0_53, %c0_54], %85 {strides = array<i32>} : memref<8x8x128xf32, #tpu.memory_space<vmem>>, vector<1x8x128xf32>,
    %c8_i32 = arith.constant 8 : i32
    %c0_55 = arith.constant 0 : index
    %c0_56 = arith.constant 0 : index
    %86 = vector.load %arg8[%c0_55, %c0_56] : memref<8x128xf32, #tpu.memory_space<vmem>>, vector<8x128xf32>
    tpu.vector_store %arg8[%c0_55, %c0_56], %81 {strides = array<i32>} : memref<8x128xf32, #tpu.memory_space<vmem>>, vector<8x128xf32>,
    return
  }
  func.func @transform_0(%arg0: i32, %arg1: i32) -> (i32, i32, i32) {
    %c0_i32 = arith.constant 0 : i32
    %c0_i32_0 = arith.constant 0 : i32
    return %arg1, %arg0, %c0_i32 : i32, i32, i32
  }
  func.func @transform_1(%arg0: i32, %arg1: i32) -> (i32, i32) {
    %c0_i32 = arith.constant 0 : i32
    %c0_i32_0 = arith.constant 0 : i32
    return %arg0, %c0_i32 : i32, i32
  }
  func.func @transform_2(%arg0: i32, %arg1: i32) -> (i32, i32) {
    %c0_i32 = arith.constant 0 : i32
    %c0_i32_0 = arith.constant 0 : i32
    %c0_i32_1 = arith.constant 0 : i32
    return %c0_i32, %c0_i32_0 : i32, i32
  }
  func.func @transform_3(%arg0: i32, %arg1: i32) -> (i32, i32) {
    %c0_i32 = arith.constant 0 : i32
    %c0_i32_0 = arith.constant 0 : i32
    %c0_i32_1 = arith.constant 0 : i32
    return %c0_i32, %c0_i32_0 : i32, i32
  }
  func.func @transform_4(%arg0: i32, %arg1: i32) -> (i32, i32) {
    %c0_i32 = arith.constant 0 : i32
    %c0_i32_0 = arith.constant 0 : i32
    %c0_i32_1 = arith.constant 0 : i32
    return %c0_i32, %c0_i32_0 : i32, i32
  }
  func.func @transform_5(%arg0: i32, %arg1: i32) -> (i32, i32, i32) {
    %c0_i32 = arith.constant 0 : i32
    %c0_i32_0 = arith.constant 0 : i32
    return %arg1, %arg0, %c0_i32 : i32, i32, i32
  }
}

</mosaic_0001>

<llo_original>
// kernel: tpu_custom_call.1
$region0: #{tpu_custom_call.1}
  #allocation0 [shape = 'u32[]', space=smem, size = 0x4, offset = 0x4, fixed_abs, tag = 'smem constant byte address 0x4 - core index']
  #allocation1 [shape = 'u32[144,128]{1,0:T(1,128)}', space=vmem, size = 0x12000, scoped, tag = 'internal scratch']
  #allocation2 [shape = 'f32[8,128]{1,0:T(8,128)}', space=vmem, size = 0x1000, scoped, tag = 'scratch operand']
  %s0 = inlined_call_operand.hbm [shape: f32[16,8,128], index: 0, kind: input, shape index: {}]
  %s1 = inlined_call_operand.hbm [shape: f32[8,128], index: 1, kind: input, shape index: {}]
  %s2 = inlined_call_operand.hbm [shape: f32[128,128], index: 2, kind: input, shape index: {}]
  %s3 = inlined_call_operand.hbm [shape: f32[128,128], index: 3, kind: input, shape index: {}]
  %s4 = inlined_call_operand.vmem [shape: f32[1,128], index: 4, kind: input, shape index: {}]
  %s5 = inlined_call_operand.hbm [shape: f32[16,8,128], index: 5, kind: output, shape index: {}]
  %s6 = sld [smem:[#allocation0]]
  $region73: #{tpu_custom_call.1} parent=0
    _
  %s8 = ssub.s32 1, %s6
  %s9 = scalar_select 0, %s8, %s6
  $region1: #{tpu_custom_call.1} parent=0
    #allocation3 [shape = 'u8[65536]{0}', space=vmem, size = 0x10000, scoped, tag = 'input window, operand 0']
    #allocation4 [shape = 's32[2]{0}', space=sflag, size = 0x8, scoped, tag = 'scoped memory for tpu_custom_call.1']
    #allocation5 [shape = 's32[2]{0}', space=sflag, size = 0x8, scoped, tag = 'scoped memory for tpu_custom_call.1']
    #allocation6 [shape = 'u8[4096]{0}', space=vmem, size = 0x1000, scoped, tag = 'input window, operand 1, single buffered']
    #allocation7 [shape = 's32[1]{0}', space=sflag, size = 0x4, scoped, tag = 'scoped memory for tpu_custom_call.1']
    #allocation8 [shape = 'u8[65536]{0}', space=vmem, size = 0x10000, scoped, tag = 'input window, operand 2, single buffered']
    #allocation9 [shape = 'u8[65536]{0}', space=vmem, size = 0x10000, scoped, tag = 'input window, operand 3, single buffered']
    #allocation10 [shape = 's32[1]{0}', space=sflag, size = 0x4, scoped, tag = 'scoped memory for tpu_custom_call.1']
    #allocation11 [shape = 'u8[65536]{0}', space=vmem, size = 0x10000, scoped, tag = 'output window, operand 0']
    %10 = vsyncpa [#allocation4], 0
    %s11 = scalar_lea.sflag [#allocation4], 1
    %12 = vsyncpa %s11, 0
    %13 = vsyncpa [#allocation7], 0
    %14 = vsyncpa [#allocation10], 0
    %15 = vsyncpa [#allocation5], 0
    %s16 = scalar_lea.sflag [#allocation5], 1
    %17 = vsyncpa %s16, 0
    loop: start=0, step=1, limit=4
    $region2: #{tpu_custom_call.1} parent=1 // loop_pre_header
      _
    $region3: #{tpu_custom_call.1} parent=1 // loop_header
      %s19 = sphi 0, %s23
      %p20 = scmp.ge.s32.totalorder %s19, 4
      %s26 = sphi 0, %s38
      %s27 = sphi 0, %s34
      %s28 = sphi 0, %s26
      %s29 = sphi 0, %s27
      %s30 = sphi 0, %s28
      %s31 = sphi 0, %s29
      %s43 = sphi 0, %s45
      %s46 = sphi 0, %s43
      %s47 = sphi 0, %s46
      %s63 = sphi 0, %s47
      %s69 = sphi 0, %s71
      %s72 = sphi 0, %s69
      %s73 = sphi 0, %s72
      %s89 = sphi 0, %s73
      %s93 = sphi 0, %s93
      %s95 = sphi 0, %s93
      %s96 = sphi 0, %s95
      %s110 = sphi 0, %s96
      %s114 = sphi 0, %s114
      %s116 = sphi 0, %s114
      %s117 = sphi 0, %s116
      %s131 = sphi 0, %s117
      %s135 = sphi 0, %s135
      %s137 = sphi 0, %s135
      %s138 = sphi 0, %s137
      %s152 = sphi 0, %s138
      %s160 = sphi 0, %s162
      %s163 = sphi 0, %s160
      %s164 = sphi 0, %s163
      %s180 = sphi 0, %s164
    $region4: #{tpu_custom_call.1} parent=1 // loop_header_branch
      %22 = sbr.rel (%p20) target = $region8
    $region5: #{tpu_custom_call.1} parent=1 // loop_body
      %s24 = ssub.s32 %s19, 1
      %s25 = ssub.s32 %s19, 2
      %s32 = sadd.s32 1, %s27
      %p33 = scmp.ge.s32.totalorder %s32, 2
      %s34 = scalar_select %p33, 0, %s32
      %s35 = sadd.s32 1, %s26
      %s36 = scalar_select %p33, %s35, %s26
      %p37 = scmp.ge.s32.totalorder %s36, 1
      %s38 = scalar_select %p37, 0, %s36
      %s39 = ssub.s32 %s27, %s34
      %s40 = ssub.s32 %s26, %s38
      %s41 = sor.u32 %s39, %s40
      %p42 = scmp.eq.s32.totalorder %s41, 0
      %s44 = sadd.s32 %s43, 1
      %s45 = scalar_select %p42, %s43, %s44
      %p48 = pneg %p42
      %p49 = scmp.eq.s32.totalorder %s19, 1
      %p50 = por %p48, %p49
      %p51 = scmp.ne.s32.totalorder %s43, %s46
      %p52 = scmp.eq.s32.totalorder %s19, 0
      %p53 = por %p51, %p52
      %p54 = scmp.ne.s32.totalorder %s43, %s46
      %p55 = scmp.eq.s32.totalorder %s24, 1
      %p56 = por %p54, %p55
      %p57 = scmp.ne.s32.totalorder %s46, %s47
      %p58 = scmp.eq.s32.totalorder %s24, 0
      %p59 = por %p57, %p58
      %p60 = scmp.ne.s32.totalorder %s46, %s47
      %p61 = scmp.eq.s32.totalorder %s25, 1
      %p62 = por %p60, %p61
      %p64 = scmp.ne.s32.totalorder %s47, %s63
      %p65 = scmp.eq.s32.totalorder %s25, 0
      %p66 = por %p64, %p65
      %s67 = ssub.s32 %s26, %s38
      %p68 = scmp.eq.s32.totalorder %s67, 0
      %s70 = sadd.s32 %s69, 1
      %s71 = scalar_select %p68, %s69, %s70
      %p74 = pneg %p68
      %p75 = scmp.eq.s32.totalorder %s19, 1
      %p76 = por %p74, %p75
      %p77 = scmp.ne.s32.totalorder %s69, %s72
      %p78 = scmp.eq.s32.totalorder %s19, 0
      %p79 = por %p77, %p78
      %p80 = scmp.ne.s32.totalorder %s69, %s72
      %p81 = scmp.eq.s32.totalorder %s24, 1
      %p82 = por %p80, %p81
      %p83 = scmp.ne.s32.totalorder %s72, %s73
      %p84 = scmp.eq.s32.totalorder %s24, 0
      %p85 = por %p83, %p84
      %p86 = scmp.ne.s32.totalorder %s72, %s73
      %p87 = scmp.eq.s32.totalorder %s25, 1
      %p88 = por %p86, %p87
      %p90 = scmp.ne.s32.totalorder %s73, %s89
      %p91 = scmp.eq.s32.totalorder %s25, 0
      %p92 = por %p90, %p91
      %s94 = sadd.s32 %s93, 1
      %p97 = scmp.eq.s32.totalorder %s19, 1
      %p98 = scmp.ne.s32.totalorder %s93, %s95
      %p99 = scmp.eq.s32.totalorder %s19, 0
      %p100 = por %p98, %p99
      %p101 = scmp.ne.s32.totalorder %s93, %s95
      %p102 = scmp.eq.s32.totalorder %s24, 1
      %p103 = por %p101, %p102
      %p104 = scmp.ne.s32.totalorder %s95, %s96
      %p105 = scmp.eq.s32.totalorder %s24, 0
      %p106 = por %p104, %p105
      %p107 = scmp.ne.s32.totalorder %s95, %s96
      %p108 = scmp.eq.s32.totalorder %s25, 1
      %p109 = por %p107, %p108
      %p111 = scmp.ne.s32.totalorder %s96, %s110
      %p112 = scmp.eq.s32.totalorder %s25, 0
      %p113 = por %p111, %p112
      %s115 = sadd.s32 %s114, 1
      %p118 = scmp.eq.s32.totalorder %s19, 1
      %p119 = scmp.ne.s32.totalorder %s114, %s116
      %p120 = scmp.eq.s32.totalorder %s19, 0
      %p121 = por %p119, %p120
      %p122 = scmp.ne.s32.totalorder %s114, %s116
      %p123 = scmp.eq.s32.totalorder %s24, 1
      %p124 = por %p122, %p123
      %p125 = scmp.ne.s32.totalorder %s116, %s117
      %p126 = scmp.eq.s32.totalorder %s24, 0
      %p127 = por %p125, %p126
      %p128 = scmp.ne.s32.totalorder %s116, %s117
      %p129 = scmp.eq.s32.totalorder %s25, 1
      %p130 = por %p128, %p129
      %p132 = scmp.ne.s32.totalorder %s117, %s131
      %p133 = scmp.eq.s32.totalorder %s25, 0
      %p134 = por %p132, %p133
      %s136 = sadd.s32 %s135, 1
      %p139 = scmp.eq.s32.totalorder %s19, 1
      %p140 = scmp.ne.s32.totalorder %s135, %s137
      %p141 = scmp.eq.s32.totalorder %s19, 0
      %p142 = por %p140, %p141
      %p143 = scmp.ne.s32.totalorder %s135, %s137
      %p144 = scmp.eq.s32.totalorder %s24, 1
      %p145 = por %p143, %p144
      %p146 = scmp.ne.s32.totalorder %s137, %s138
      %p147 = scmp.eq.s32.totalorder %s24, 0
      %p148 = por %p146, %p147
      %p149 = scmp.ne.s32.totalorder %s137, %s138
      %p150 = scmp.eq.s32.totalorder %s25, 1
      %p151 = por %p149, %p150
      %p153 = scmp.ne.s32.totalorder %s138, %s152
      %p154 = scmp.eq.s32.totalorder %s25, 0
      %p155 = por %p153, %p154
      %s156 = ssub.s32 %s27, %s34
      %s157 = ssub.s32 %s26, %s38
      %s158 = sor.u32 %s156, %s157
      %p159 = scmp.eq.s32.totalorder %s158, 0
      %s161 = sadd.s32 %s160, 1
      %s162 = scalar_select %p159, %s160, %s161
      %p165 = pneg %p159
      %p166 = scmp.eq.s32.totalorder %s19, 1
      %p167 = por %p165, %p166
      %p168 = scmp.ne.s32.totalorder %s160, %s163
      %p169 = scmp.eq.s32.totalorder %s19, 0
      %p170 = por %p168, %p169
      %p171 = scmp.ne.s32.totalorder %s160, %s163
      %p172 = scmp.eq.s32.totalorder %s24, 1
      %p173 = por %p171, %p172
      %p174 = scmp.ne.s32.totalorder %s163, %s164
      %p175 = scmp.eq.s32.totalorder %s24, 0
      %p176 = por %p174, %p175
      %p177 = scmp.ne.s32.totalorder %s163, %s164
      %p178 = scmp.eq.s32.totalorder %s25, 1
      %p179 = por %p177, %p178
      %p181 = scmp.ne.s32.totalorder %s164, %s180
      %p182 = scmp.eq.s32.totalorder %s25, 0
      %p183 = por %p181, %p182
      %p184 = scmp.le.s32.totalorder 1, %s19
      %p185 = scmp.lt.s32.totalorder %s19, 3
      %p186 = pnand %p184, %p185
      %p187 = pneg %p186
      // Predicated region
      $region9: #{tpu_custom_call.1} parent=5 // pred_check
        _
      $region10: #{tpu_custom_call.1} parent=5 // pred_check_branch
        %189 = sbr.rel (%p186) target = $region12
      $region11: #{tpu_custom_call.1} parent=5 // pred_region
        %s190 = ssub.s32 %s19, 1
        // Predicated region
        $region13: #{tpu_custom_call.1} parent=11 // pred_check
          %p191 = pneg %p85
        $region14: #{tpu_custom_call.1} parent=11 // pred_check_branch
          %193 = sbr.rel (%p191) target = $region16
        $region15: #{tpu_custom_call.1} parent=11 // pred_region
          %s195 = ssub.s32 128, 128
          %196 = vsyncadd [#allocation7], %s195
          %s197 = smul.addr %s28, 128
          %s198 = scalar_lea.hbm %s1, %s197
          %s200 = sshll.u32 [#allocation6], 4
          %s201 = int_to_ptr.vmem [resolvable:$true] %s200
          %203 = dma.hbm_to_vmem [thread:$0]  %s198, 128, %s201, [#allocation7]
        $region16: #{tpu_custom_call.1} parent=11 // pred_fallthru
          _
        // Predicated region
        $region17: #{tpu_custom_call.1} parent=11 // pred_check
          %p204 = pneg %p106
        $region18: #{tpu_custom_call.1} parent=11 // pred_check_branch
          %206 = sbr.rel (%p204) target = $region20
        $region19: #{tpu_custom_call.1} parent=11 // pred_region
          %s208 = ssub.s32 2048, 2048
          %209 = vsyncadd [#allocation7], %s208
          %s210 = sshll.u32 [#allocation8], 4
          %s211 = int_to_ptr.vmem [resolvable:$true] %s210
          %216 = dma.hbm_to_vmem [thread:$0]  %s2, 2048, %s211, [#allocation7], 128, 128, 8
        $region20: #{tpu_custom_call.1} parent=11 // pred_fallthru
          _
        // Predicated region
        $region21: #{tpu_custom_call.1} parent=11 // pred_check
          %p217 = pneg %p127
        $region22: #{tpu_custom_call.1} parent=11 // pred_check_branch
          %219 = sbr.rel (%p217) target = $region24
        $region23: #{tpu_custom_call.1} parent=11 // pred_region
          %s221 = ssub.s32 2048, 2048
          %222 = vsyncadd [#allocation10], %s221
          %s223 = sshll.u32 [#allocation9], 4
          %s224 = int_to_ptr.vmem [resolvable:$true] %s223
          %229 = dma.hbm_to_vmem [thread:$0]  %s3, 2048, %s224, [#allocation10], 128, 128, 8
        $region24: #{tpu_custom_call.1} parent=11 // pred_fallthru
          _
        // Predicated region
        $region25: #{tpu_custom_call.1} parent=11 // pred_check
          %p230 = pneg %p148
        $region26: #{tpu_custom_call.1} parent=11 // pred_check_branch
          %232 = sbr.rel (%p230) target = $region28
        $region27: #{tpu_custom_call.1} parent=11 // pred_region
          _
        $region28: #{tpu_custom_call.1} parent=11 // pred_fallthru
          _
      $region12: #{tpu_custom_call.1} parent=5 // pred_fallthru
        _
      %p233 = scmp.lt.s32.totalorder %s19, 2
      // Predicated region
      $region29: #{tpu_custom_call.1} parent=5 // pred_check
        %p234 = pneg %p233
      $region30: #{tpu_custom_call.1} parent=5 // pred_check_branch
        %236 = sbr.rel (%p234) target = $region32
      $region31: #{tpu_custom_call.1} parent=5 // pred_region
        // Predicated region
        $region33: #{tpu_custom_call.1} parent=31 // pred_check
          %p237 = pneg %p53
        $region34: #{tpu_custom_call.1} parent=31 // pred_check_branch
          %239 = sbr.rel (%p237) target = $region36
        $region35: #{tpu_custom_call.1} parent=31 // pred_region
          %s240 = sand.u32 %s43, 1
          %s241 = scalar_lea.sflag [#allocation4], %s240
          %s242 = sand.u32 %s43, 1
          %s243 = smul.addr %s242, 64
          %s244 = scalar_lea.vmem [#allocation3], %s243
          %s245 = smul.u32 8, %s27
          %s247 = ssub.s32 1024, 1024
          %248 = vsyncadd %s241, %s247
          %s249 = sadd.s32 %s26, %s245
          %s250 = smul.addr %s249, 128
          %s251 = scalar_lea.hbm %s0, %s250
          %s252 = sshll.u32 %s244, 4
          %s253 = int_to_ptr.vmem [resolvable:$true] %s252
          %258 = dma.hbm_to_vmem [thread:$0]  %s251, 1024, %s253, %s241, 128, 128, 8
        $region36: #{tpu_custom_call.1} parent=31 // pred_fallthru
          _
      $region32: #{tpu_custom_call.1} parent=5 // pred_fallthru
        _
      %p259 = scmp.le.s32.totalorder 1, %s19
      %p260 = scmp.lt.s32.totalorder %s19, 3
      %p261 = pnand %p259, %p260
      %p262 = pneg %p261
      // Predicated region
      $region37: #{tpu_custom_call.1} parent=5 // pred_check
        _
      $region38: #{tpu_custom_call.1} parent=5 // pred_check_branch
        %264 = sbr.rel (%p261) target = $region40
      $region39: #{tpu_custom_call.1} parent=5 // pred_region
        %s265 = ssub.s32 %s19, 1
        %s266 = sand.u32 %s46, 1
        %s267 = scalar_lea.sflag [#allocation4], %s266
        %s268 = sand.u32 %s46, 1
        %s269 = smul.addr %s268, 64
        %s270 = scalar_lea.vmem [#allocation3], %s269
        // Predicated region
        $region41: #{tpu_custom_call.1} parent=39 // pred_check
          %p271 = pneg %p59
        $region42: #{tpu_custom_call.1} parent=39 // pred_check_branch
          %273 = sbr.rel (%p271) target = $region44
        $region43: #{tpu_custom_call.1} parent=39 // pred_region
          %274 = dma.done %s267, 1024
        $region44: #{tpu_custom_call.1} parent=39 // pred_fallthru
          _
        // Predicated region
        $region45: #{tpu_custom_call.1} parent=39 // pred_check
          %p275 = pneg %p85
        $region46: #{tpu_custom_call.1} parent=39 // pred_check_branch
          %277 = sbr.rel (%p275) target = $region48
        $region47: #{tpu_custom_call.1} parent=39 // pred_region
          %278 = dma.done [#allocation7], 128
        $region48: #{tpu_custom_call.1} parent=39 // pred_fallthru
          _
        // Predicated region
        $region49: #{tpu_custom_call.1} parent=39 // pred_check
          %p279 = pneg %p106
        $region50: #{tpu_custom_call.1} parent=39 // pred_check_branch
          %281 = sbr.rel (%p279) target = $region52
        $region51: #{tpu_custom_call.1} parent=39 // pred_region
          %282 = dma.done [#allocation7], 2048
        $region52: #{tpu_custom_call.1} parent=39 // pred_fallthru
          _
        // Predicated region
        $region53: #{tpu_custom_call.1} parent=39 // pred_check
          %p283 = pneg %p127
        $region54: #{tpu_custom_call.1} parent=39 // pred_check_branch
          %285 = sbr.rel (%p283) target = $region56
        $region55: #{tpu_custom_call.1} parent=39 // pred_region
          %286 = dma.done [#allocation10], 2048
        $region56: #{tpu_custom_call.1} parent=39 // pred_fallthru
          _
        %s287 = sand.u32 %s46, 1
        %s288 = scalar_lea.sflag [#allocation4], %s287
        %s289 = sand.u32 %s46, 1
        %s290 = smul.addr %s289, 64
        %s291 = scalar_lea.vmem [#allocation3], %s290
        %p292 = pneg %p59
        %p293 = pneg %p56
        %p294 = pneg %p85
        %p295 = pneg %p82
        %p296 = pneg %p106
        %p297 = pneg %p103
        %p298 = pneg %p127
        %p299 = pneg %p124
        %p300 = pneg %p148
        %p301 = pneg %p145
        %p302 = pneg %p176
        %p303 = pneg %p173
        %s304 = sand.u32 %s163, 1
        %s305 = scalar_lea.sflag [#allocation5], %s304
        %s306 = sand.u32 %s163, 1
        %s307 = smul.addr %s306, 64
        %s308 = scalar_lea.vmem [#allocation11], %s307
        %s309 = smul.u32 8, %s29
        %s310 = smul.u32 8, %s29
        %p311 = scmp.eq.s32.totalorder %s29, 0
        // Predicated region
        $region57: #{tpu_custom_call.1} parent=39 // pred_check
          %p312 = pneg %p311
        $region58: #{tpu_custom_call.1} parent=39 // pred_check_branch
          %314 = sbr.rel (%p312) target = $region60
        $region59: #{tpu_custom_call.1} parent=39 // pred_region
          %v315 = vld [vmem:[#allocation6] sm:$0xff]
          %316 = vst [vmem:[#allocation2] sm:$0xff] %v315
        $region60: #{tpu_custom_call.1} parent=39 // pred_fallthru
          _
        %v317 = vld [vmem:[%s270] sm:$0xff]
        %v318 = vld [vmem:[%s270 + $0x8] sm:$0xff]
        %v319 = vld [vmem:[%s270 + $0x10] sm:$0xff]
        %v320 = vld [vmem:[%s270 + $0x18] sm:$0xff]
        %v321 = vld [vmem:[%s270 + $0x20] sm:$0xff]
        %v322 = vld [vmem:[%s270 + $0x28] sm:$0xff]
        %v323 = vld [vmem:[%s270 + $0x30] sm:$0xff]
        %v324 = vld [vmem:[%s270 + $0x38] sm:$0xff]
        %v325 = vld [vmem:[#allocation8] sm:$0xff]
        %v326 = vld [vmem:[#allocation8 + $0x8] sm:$0xff]
        %v327 = vld [vmem:[#allocation8 + $0x10] sm:$0xff]
        %v328 = vld [vmem:[#allocation8 + $0x18] sm:$0xff]
        %v329 = vld [vmem:[#allocation8 + $0x20] sm:$0xff]
        %v330 = vld [vmem:[#allocation8 + $0x28] sm:$0xff]
        %v331 = vld [vmem:[#allocation8 + $0x30] sm:$0xff]
        %v332 = vld [vmem:[#allocation8 + $0x38] sm:$0xff]
        %v333 = vld [vmem:[#allocation8 + $0x40] sm:$0xff]
        %v334 = vld [vmem:[#allocation8 + $0x48] sm:$0xff]
        %v335 = vld [vmem:[#allocation8 + $0x50] sm:$0xff]
        %v336 = vld [vmem:[#allocation8 + $0x58] sm:$0xff]
        %v337 = vld [vmem:[#allocation8 + $0x60] sm:$0xff]
        %v338 = vld [vmem:[#allocation8 + $0x68] sm:$0xff]
        %v339 = vld [vmem:[#allocation8 + $0x70] sm:$0xff]
        %v340 = vld [vmem:[#allocation8 + $0x78] sm:$0xff]
        %v341 = vld [vmem:[%s4] sm:$0x1]
        %v343 = vlaneseq
        %v344 = vshrl.u32 %v343, 7
        %v345 = vsub.s32 0, %v344
        %v346 = vrot.slane %v341, %v345
        %348 = vmatprep.subr.mxu0 0.0
        %349 = vmatpush1.msra.mxu0 %v325
        %350 = vmatprep.subr.mxu0 0.0
        %351 = vmatpush1.msra.mxu0 %v326
        %352 = vmatprep.subr.mxu0 0.0
        %353 = vmatpush1.msra.mxu0 %v327
        %354 = vmatprep.subr.mxu0 0.0
        %355 = vmatpush1.msra.mxu0 %v328
        %356 = vmatprep.subr.mxu0 0.0
        %357 = vmatpush1.msra.mxu0 %v329
        %358 = vmatprep.subr.mxu0 0.0
        %359 = vmatpush1.msra.mxu0 %v330
        %360 = vmatprep.subr.mxu0 0.0
        %361 = vmatpush1.msra.mxu0 %v331
        %362 = vmatprep.subr.mxu0 0.0
        %363 = vmatpush1.msra.mxu0 %v332
        %364 = vmatprep.subr.mxu0 0.0
        %365 = vmatpush1.msra.mxu0 %v333
        %366 = vmatprep.subr.mxu0 0.0
        %367 = vmatpush1.msra.mxu0 %v334
        %368 = vmatprep.subr.mxu0 0.0
        %369 = vmatpush1.msra.mxu0 %v335
        %370 = vmatprep.subr.mxu0 0.0
        %371 = vmatpush1.msra.mxu0 %v336
        %372 = vmatprep.subr.mxu0 0.0
        %373 = vmatpush1.msra.mxu0 %v337
        %374 = vmatprep.subr.mxu0 0.0
        %375 = vmatpush1.msra.mxu0 %v338
        %376 = vmatprep.subr.mxu0 0.0
        %377 = vmatpush1.msra.mxu0 %v339
        %378 = vmatprep.subr.mxu0 0.0
        %379 = vmatpush1.msra.mxu0 %v340
        %380 = vmatprep.subr.mxu0 0.0
        %381 = vmatpush1.msra.mxu0 0.0
        %382 = vmatprep.subr.mxu0 0.0
        %383 = vmatpush1.msra.mxu0 0.0
        %384 = vmatprep.subr.mxu0 0.0
        %385 = vmatpush1.msra.mxu0 0.0
        %386 = vmatprep.subr.mxu0 0.0
        %387 = vmatpush1.msra.mxu0 0.0
        %388 = vmatprep.subr.mxu0 0.0
        %389 = vmatpush1.msra.mxu0 0.0
        %390 = vmatprep.subr.mxu0 0.0
        %391 = vmatpush1.msra.mxu0 0.0
        %392 = vmatprep.subr.mxu0 0.0
        %393 = vmatpush1.msra.mxu0 0.0
        %394 = vmatprep.subr.mxu0 0.0
        %395 = vmatpush1.msra.mxu0 0.0
        %396 = vmatprep.subr.mxu0 0.0
        %397 = vmatpush1.msra.mxu0 0.0
        %398 = vmatprep.subr.mxu0 0.0
        %399 = vmatpush1.msra.mxu0 0.0
        %400 = vmatprep.subr.mxu0 0.0
        %401 = vmatpush1.msra.mxu0 0.0
        %402 = vmatprep.subr.mxu0 0.0
        %403 = vmatpush1.msra.mxu0 0.0
        %404 = vmatprep.subr.mxu0 0.0
        %405 = vmatpush1.msra.mxu0 0.0
        %406 = vmatprep.subr.mxu0 0.0
        %407 = vmatpush1.msra.mxu0 0.0
        %408 = vmatprep.subr.mxu0 0.0
        %409 = vmatpush1.msra.mxu0 0.0
        %410 = vmatprep.subr.mxu0 0.0
        %411 = vmatpush1.msra.mxu0 0.0
        %412 = vmatprep.mubr.f32.mxu0 0.0
        %413 = vmatmul.mubr.f32.gmra.mrb[0].mxu0 %v317
        %v414 = vpop.f32.mrb[0].mxu0
        %v415 = vadd.f32 %v346, %v414
        %v416 = vpop.f32.mrb[0].mxu0
        %417 = vmatprep.mubr.f32.mxu0 0.0
        %418 = vmatmul.mubr.f32.gmra.mrb[0].mxu0 %v318
        %v419 = vpop.f32.mrb[0].mxu0
        %v420 = vadd.f32 %v346, %v419
        %v421 = vpop.f32.mrb[0].mxu0
        %422 = vmatprep.mubr.f32.mxu0 0.0
        %423 = vmatmul.mubr.f32.gmra.mrb[0].mxu0 %v319
        %v424 = vpop.f32.mrb[0].mxu0
        %v425 = vadd.f32 %v346, %v424
        %v426 = vpop.f32.mrb[0].mxu0
        %427 = vmatprep.mubr.f32.mxu0 0.0
        %428 = vmatmul.mubr.f32.gmra.mrb[0].mxu0 %v320
        %v429 = vpop.f32.mrb[0].mxu0
        %v430 = vadd.f32 %v346, %v429
        %v431 = vpop.f32.mrb[0].mxu0
        %432 = vmatprep.mubr.f32.mxu0 0.0
        %433 = vmatmul.mubr.f32.gmra.mrb[0].mxu0 %v321
        %v434 = vpop.f32.mrb[0].mxu0
        %v435 = vadd.f32 %v346, %v434
        %v436 = vpop.f32.mrb[0].mxu0
        %437 = vmatprep.mubr.f32.mxu0 0.0
        %438 = vmatmul.mubr.f32.gmra.mrb[0].mxu0 %v322
        %v439 = vpop.f32.mrb[0].mxu0
        %v440 = vadd.f32 %v346, %v439
        %v441 = vpop.f32.mrb[0].mxu0
        %442 = vmatprep.mubr.f32.mxu0 0.0
        %443 = vmatmul.mubr.f32.gmra.mrb[0].mxu0 %v323
        %v444 = vpop.f32.mrb[0].mxu0
        %v445 = vadd.f32 %v346, %v444
        %v446 = vpop.f32.mrb[0].mxu0
        %447 = vmatprep.mubr.f32.mxu0 0.0
        %448 = vmatmul.mubr.f32.gmra.mrb[0].mxu0 %v324
        %v449 = vpop.f32.mrb[0].mxu0
        %v450 = vadd.f32 %v346, %v449
        %v451 = vpop.f32.mrb[0].mxu0
        %452 = vdwg.mxu0
        %453 = vst [vmem:[%s308] sm:$0xff] %v415
        %454 = vst [vmem:[%s308 + $0x8] sm:$0xff] %v420
        %455 = vst [vmem:[%s308 + $0x10] sm:$0xff] %v425
        %456 = vst [vmem:[%s308 + $0x18] sm:$0xff] %v430
        %457 = vst [vmem:[%s308 + $0x20] sm:$0xff] %v435
        %458 = vst [vmem:[%s308 + $0x28] sm:$0xff] %v440
        %459 = vst [vmem:[%s308 + $0x30] sm:$0xff] %v445
        %460 = vst [vmem:[%s308 + $0x38] sm:$0xff] %v450
        %v461 = vld [vmem:[#allocation9] sm:$0xff]
        %v462 = vld [vmem:[#allocation9 + $0x8] sm:$0xff]
        %v463 = vld [vmem:[#allocation9 + $0x10] sm:$0xff]
        %v464 = vld [vmem:[#allocation9 + $0x18] sm:$0xff]
        %v465 = vld [vmem:[#allocation9 + $0x20] sm:$0xff]
        %v466 = vld [vmem:[#allocation9 + $0x28] sm:$0xff]
        %v467 = vld [vmem:[#allocation9 + $0x30] sm:$0xff]
        %v468 = vld [vmem:[#allocation9 + $0x38] sm:$0xff]
        %v469 = vld [vmem:[#allocation9 + $0x40] sm:$0xff]
        %v470 = vld [vmem:[#allocation9 + $0x48] sm:$0xff]
        %v471 = vld [vmem:[#allocation9 + $0x50] sm:$0xff]
        %v472 = vld [vmem:[#allocation9 + $0x58] sm:$0xff]
        %v473 = vld [vmem:[#allocation9 + $0x60] sm:$0xff]
        %v474 = vld [vmem:[#allocation9 + $0x68] sm:$0xff]
        %v475 = vld [vmem:[#allocation9 + $0x70] sm:$0xff]
        %v476 = vld [vmem:[#allocation9 + $0x78] sm:$0xff]
        %v477 = vld [vmem:[#allocation2] sm:$0xff]
        %v478 = vld [vmem:[%s308] sm:$0xff]
        %479 = vmatprep.subr.mxu0 0.0
        %480 = vmatpush1.msra.mxu0 %v461
        %481 = vmatprep.subr.mxu0 0.0
        %482 = vmatpush1.msra.mxu0 %v462
        %483 = vmatprep.subr.mxu0 0.0
        %484 = vmatpush1.msra.mxu0 %v463
        %485 = vmatprep.subr.mxu0 0.0
        %486 = vmatpush1.msra.mxu0 %v464
        %487 = vmatprep.subr.mxu0 0.0
        %488 = vmatpush1.msra.mxu0 %v465
        %489 = vmatprep.subr.mxu0 0.0
        %490 = vmatpush1.msra.mxu0 %v466
        %491 = vmatprep.subr.mxu0 0.0
        %492 = vmatpush1.msra.mxu0 %v467
        %493 = vmatprep.subr.mxu0 0.0
        %494 = vmatpush1.msra.mxu0 %v468
        %495 = vmatprep.subr.mxu0 0.0
        %496 = vmatpush1.msra.mxu0 %v469
        %497 = vmatprep.subr.mxu0 0.0
        %498 = vmatpush1.msra.mxu0 %v470
        %499 = vmatprep.subr.mxu0 0.0
        %500 = vmatpush1.msra.mxu0 %v471
        %501 = vmatprep.subr.mxu0 0.0
        %502 = vmatpush1.msra.mxu0 %v472
        %503 = vmatprep.subr.mxu0 0.0
        %504 = vmatpush1.msra.mxu0 %v473
        %505 = vmatprep.subr.mxu0 0.0
        %506 = vmatpush1.msra.mxu0 %v474
        %507 = vmatprep.subr.mxu0 0.0
        %508 = vmatpush1.msra.mxu0 %v475
        %509 = vmatprep.subr.mxu0 0.0
        %510 = vmatpush1.msra.mxu0 %v476
        %511 = vmatprep.subr.mxu0 0.0
        %512 = vmatpush1.msra.mxu0 0.0
        %513 = vmatprep.subr.mxu0 0.0
        %514 = vmatpush1.msra.mxu0 0.0
        %515 = vmatprep.subr.mxu0 0.0
        %516 = vmatpush1.msra.mxu0 0.0
        %517 = vmatprep.subr.mxu0 0.0
        %518 = vmatpush1.msra.mxu0 0.0
        %519 = vmatprep.subr.mxu0 0.0
        %520 = vmatpush1.msra.mxu0 0.0
        %521 = vmatprep.subr.mxu0 0.0
        %522 = vmatpush1.msra.mxu0 0.0
        %523 = vmatprep.subr.mxu0 0.0
        %524 = vmatpush1.msra.mxu0 0.0
        %525 = vmatprep.subr.mxu0 0.0
        %526 = vmatpush1.msra.mxu0 0.0
        %527 = vmatprep.subr.mxu0 0.0
        %528 = vmatpush1.msra.mxu0 0.0
        %529 = vmatprep.subr.mxu0 0.0
        %530 = vmatpush1.msra.mxu0 0.0
        %531 = vmatprep.subr.mxu0 0.0
        %532 = vmatpush1.msra.mxu0 0.0
        %533 = vmatprep.subr.mxu0 0.0
        %534 = vmatpush1.msra.mxu0 0.0
        %535 = vmatprep.subr.mxu0 0.0
        %536 = vmatpush1.msra.mxu0 0.0
        %537 = vmatprep.subr.mxu0 0.0
        %538 = vmatpush1.msra.mxu0 0.0
        %539 = vmatprep.subr.mxu0 0.0
        %540 = vmatpush1.msra.mxu0 0.0
        %541 = vmatprep.subr.mxu0 0.0
        %542 = vmatpush1.msra.mxu0 0.0
        %543 = vmatprep.mubr.f32.mxu0 0.0
        %544 = vmatmul.mubr.f32.gmra.mrb[0].mxu0 %v477
        %v545 = vpop.f32.mrb[0].mxu0
        %v546 = vadd.f32 %v478, %v545
        %v547 = vpop.f32.mrb[0].mxu0
        %548 = vdwg.mxu0
        %549 = vst [vmem:[%s308] sm:$0xff] %v546
        %s550 = scalar_lea.vmem %s308, 8 [#allocation11]
        %v551 = vld [vmem:[%s550] sm:$0xff]
        %552 = vmatprep.subr.mxu0 0.0
        %553 = vmatpush1.msra.mxu0 %v461
        %554 = vmatprep.subr.mxu0 0.0
        %555 = vmatpush1.msra.mxu0 %v462
        %556 = vmatprep.subr.mxu0 0.0
        %557 = vmatpush1.msra.mxu0 %v463
        %558 = vmatprep.subr.mxu0 0.0
        %559 = vmatpush1.msra.mxu0 %v464
        %560 = vmatprep.subr.mxu0 0.0
        %561 = vmatpush1.msra.mxu0 %v465
        %562 = vmatprep.subr.mxu0 0.0
        %563 = vmatpush1.msra.mxu0 %v466
        %564 = vmatprep.subr.mxu0 0.0
        %565 = vmatpush1.msra.mxu0 %v467
        %566 = vmatprep.subr.mxu0 0.0
        %567 = vmatpush1.msra.mxu0 %v468
        %568 = vmatprep.subr.mxu0 0.0
        %569 = vmatpush1.msra.mxu0 %v469
        %570 = vmatprep.subr.mxu0 0.0
        %571 = vmatpush1.msra.mxu0 %v470
        %572 = vmatprep.subr.mxu0 0.0
        %573 = vmatpush1.msra.mxu0 %v471
        %574 = vmatprep.subr.mxu0 0.0
        %575 = vmatpush1.msra.mxu0 %v472
        %576 = vmatprep.subr.mxu0 0.0
        %577 = vmatpush1.msra.mxu0 %v473
        %578 = vmatprep.subr.mxu0 0.0
        %579 = vmatpush1.msra.mxu0 %v474
        %580 = vmatprep.subr.mxu0 0.0
        %581 = vmatpush1.msra.mxu0 %v475
        %582 = vmatprep.subr.mxu0 0.0
        %583 = vmatpush1.msra.mxu0 %v476
        %584 = vmatprep.subr.mxu0 0.0
        %585 = vmatpush1.msra.mxu0 0.0
        %586 = vmatprep.subr.mxu0 0.0
        %587 = vmatpush1.msra.mxu0 0.0
        %588 = vmatprep.subr.mxu0 0.0
        %589 = vmatpush1.msra.mxu0 0.0
        %590 = vmatprep.subr.mxu0 0.0
        %591 = vmatpush1.msra.mxu0 0.0
        %592 = vmatprep.subr.mxu0 0.0
        %593 = vmatpush1.msra.mxu0 0.0
        %594 = vmatprep.subr.mxu0 0.0
        %595 = vmatpush1.msra.mxu0 0.0
        %596 = vmatprep.subr.mxu0 0.0
        %597 = vmatpush1.msra.mxu0 0.0
        %598 = vmatprep.subr.mxu0 0.0
        %599 = vmatpush1.msra.mxu0 0.0
        %600 = vmatprep.subr.mxu0 0.0
        %601 = vmatpush1.msra.mxu0 0.0
        %602 = vmatprep.subr.mxu0 0.0
        %603 = vmatpush1.msra.mxu0 0.0
        %604 = vmatprep.subr.mxu0 0.0
        %605 = vmatpush1.msra.mxu0 0.0
        %606 = vmatprep.subr.mxu0 0.0
        %607 = vmatpush1.msra.mxu0 0.0
        %608 = vmatprep.subr.mxu0 0.0
        %609 = vmatpush1.msra.mxu0 0.0
        %610 = vmatprep.subr.mxu0 0.0
        %611 = vmatpush1.msra.mxu0 0.0
        %612 = vmatprep.subr.mxu0 0.0
        %613 = vmatpush1.msra.mxu0 0.0
        %614 = vmatprep.subr.mxu0 0.0
        %615 = vmatpush1.msra.mxu0 0.0
        %616 = vmatprep.mubr.f32.mxu0 0.0
        %617 = vmatmul.mubr.f32.gmra.mrb[0].mxu0 %v546
        %v618 = vpop.f32.mrb[0].mxu0
        %v619 = vadd.f32 %v551, %v618
        %v620 = vpop.f32.mrb[0].mxu0
        %621 = vdwg.mxu0
        %622 = vst [vmem:[%s550] sm:$0xff] %v619
        %s623 = scalar_lea.vmem %s308, 16 [#allocation11]
        %v624 = vld [vmem:[%s623] sm:$0xff]
        %625 = vmatprep.subr.mxu0 0.0
        %626 = vmatpush1.msra.mxu0 %v461
        %627 = vmatprep.subr.mxu0 0.0
        %628 = vmatpush1.msra.mxu0 %v462
        %629 = vmatprep.subr.mxu0 0.0
        %630 = vmatpush1.msra.mxu0 %v463
        %631 = vmatprep.subr.mxu0 0.0
        %632 = vmatpush1.msra.mxu0 %v464
        %633 = vmatprep.subr.mxu0 0.0
        %634 = vmatpush1.msra.mxu0 %v465
        %635 = vmatprep.subr.mxu0 0.0
        %636 = vmatpush1.msra.mxu0 %v466
        %637 = vmatprep.subr.mxu0 0.0
        %638 = vmatpush1.msra.mxu0 %v467
        %639 = vmatprep.subr.mxu0 0.0
        %640 = vmatpush1.msra.mxu0 %v468
        %641 = vmatprep.subr.mxu0 0.0
        %642 = vmatpush1.msra.mxu0 %v469
        %643 = vmatprep.subr.mxu0 0.0
        %644 = vmatpush1.msra.mxu0 %v470
        %645 = vmatprep.subr.mxu0 0.0
        %646 = vmatpush1.msra.mxu0 %v471
        %647 = vmatprep.subr.mxu0 0.0
        %648 = vmatpush1.msra.mxu0 %v472
        %649 = vmatprep.subr.mxu0 0.0
        %650 = vmatpush1.msra.mxu0 %v473
        %651 = vmatprep.subr.mxu0 0.0
        %652 = vmatpush1.msra.mxu0 %v474
        %653 = vmatprep.subr.mxu0 0.0
        %654 = vmatpush1.msra.mxu0 %v475
        %655 = vmatprep.subr.mxu0 0.0
        %656 = vmatpush1.msra.mxu0 %v476
        %657 = vmatprep.subr.mxu0 0.0
        %658 = vmatpush1.msra.mxu0 0.0
        %659 = vmatprep.subr.mxu0 0.0
        %660 = vmatpush1.msra.mxu0 0.0
        %661 = vmatprep.subr.mxu0 0.0
        %662 = vmatpush1.msra.mxu0 0.0
        %663 = vmatprep.subr.mxu0 0.0
        %664 = vmatpush1.msra.mxu0 0.0
        %665 = vmatprep.subr.mxu0 0.0
        %666 = vmatpush1.msra.mxu0 0.0
        %667 = vmatprep.subr.mxu0 0.0
        %668 = vmatpush1.msra.mxu0 0.0
        %669 = vmatprep.subr.mxu0 0.0
        %670 = vmatpush1.msra.mxu0 0.0
        %671 = vmatprep.subr.mxu0 0.0
        %672 = vmatpush1.msra.mxu0 0.0
        %673 = vmatprep.subr.mxu0 0.0
        %674 = vmatpush1.msra.mxu0 0.0
        %675 = vmatprep.subr.mxu0 0.0
        %676 = vmatpush1.msra.mxu0 0.0
        %677 = vmatprep.subr.mxu0 0.0
        %678 = vmatpush1.msra.mxu0 0.0
        %679 = vmatprep.subr.mxu0 0.0
        %680 = vmatpush1.msra.mxu0 0.0
        %681 = vmatprep.subr.mxu0 0.0
        %682 = vmatpush1.msra.mxu0 0.0
        %683 = vmatprep.subr.mxu0 0.0
        %684 = vmatpush1.msra.mxu0 0.0
        %685 = vmatprep.subr.mxu0 0.0
        %686 = vmatpush1.msra.mxu0 0.0
        %687 = vmatprep.subr.mxu0 0.0
        %688 = vmatpush1.msra.mxu0 0.0
        %689 = vmatprep.mubr.f32.mxu0 0.0
        %690 = vmatmul.mubr.f32.gmra.mrb[0].mxu0 %v619
        %v691 = vpop.f32.mrb[0].mxu0
        %v692 = vadd.f32 %v624, %v691
        %v693 = vpop.f32.mrb[0].mxu0
        %694 = vdwg.mxu0
        %695 = vst [vmem:[%s623] sm:$0xff] %v692
        %s696 = scalar_lea.vmem %s308, 24 [#allocation11]
        %v697 = vld [vmem:[%s696] sm:$0xff]
        %698 = vmatprep.subr.mxu0 0.0
        %699 = vmatpush1.msra.mxu0 %v461
        %700 = vmatprep.subr.mxu0 0.0
        %701 = vmatpush1.msra.mxu0 %v462
        %702 = vmatprep.subr.mxu0 0.0
        %703 = vmatpush1.msra.mxu0 %v463
        %704 = vmatprep.subr.mxu0 0.0
        %705 = vmatpush1.msra.mxu0 %v464
        %706 = vmatprep.subr.mxu0 0.0
        %707 = vmatpush1.msra.mxu0 %v465
        %708 = vmatprep.subr.mxu0 0.0
        %709 = vmatpush1.msra.mxu0 %v466
        %710 = vmatprep.subr.mxu0 0.0
        %711 = vmatpush1.msra.mxu0 %v467
        %712 = vmatprep.subr.mxu0 0.0
        %713 = vmatpush1.msra.mxu0 %v468
        %714 = vmatprep.subr.mxu0 0.0
        %715 = vmatpush1.msra.mxu0 %v469
        %716 = vmatprep.subr.mxu0 0.0
        %717 = vmatpush1.msra.mxu0 %v470
        %718 = vmatprep.subr.mxu0 0.0
        %719 = vmatpush1.msra.mxu0 %v471
        %720 = vmatprep.subr.mxu0 0.0
        %721 = vmatpush1.msra.mxu0 %v472
        %722 = vmatprep.subr.mxu0 0.0
        %723 = vmatpush1.msra.mxu0 %v473
        %724 = vmatprep.subr.mxu0 0.0
        %725 = vmatpush1.msra.mxu0 %v474
        %726 = vmatprep.subr.mxu0 0.0
        %727 = vmatpush1.msra.mxu0 %v475
        %728 = vmatprep.subr.mxu0 0.0
        %729 = vmatpush1.msra.mxu0 %v476
        %730 = vmatprep.subr.mxu0 0.0
        %731 = vmatpush1.msra.mxu0 0.0
        %732 = vmatprep.subr.mxu0 0.0
        %733 = vmatpush1.msra.mxu0 0.0
        %734 = vmatprep.subr.mxu0 0.0
        %735 = vmatpush1.msra.mxu0 0.0
        %736 = vmatprep.subr.mxu0 0.0
        %737 = vmatpush1.msra.mxu0 0.0
        %738 = vmatprep.subr.mxu0 0.0
        %739 = vmatpush1.msra.mxu0 0.0
        %740 = vmatprep.subr.mxu0 0.0
        %741 = vmatpush1.msra.mxu0 0.0
        %742 = vmatprep.subr.mxu0 0.0
        %743 = vmatpush1.msra.mxu0 0.0
        %744 = vmatprep.subr.mxu0 0.0
        %745 = vmatpush1.msra.mxu0 0.0
        %746 = vmatprep.subr.mxu0 0.0
        %747 = vmatpush1.msra.mxu0 0.0
        %748 = vmatprep.subr.mxu0 0.0
        %749 = vmatpush1.msra.mxu0 0.0
        %750 = vmatprep.subr.mxu0 0.0
        %751 = vmatpush1.msra.mxu0 0.0
        %752 = vmatprep.subr.mxu0 0.0
        %753 = vmatpush1.msra.mxu0 0.0
        %754 = vmatprep.subr.mxu0 0.0
        %755 = vmatpush1.msra.mxu0 0.0
        %756 = vmatprep.subr.mxu0 0.0
        %757 = vmatpush1.msra.mxu0 0.0
        %758 = vmatprep.subr.mxu0 0.0
        %759 = vmatpush1.msra.mxu0 0.0
        %760 = vmatprep.subr.mxu0 0.0
        %761 = vmatpush1.msra.mxu0 0.0
        %762 = vmatprep.mubr.f32.mxu0 0.0
        %763 = vmatmul.mubr.f32.gmra.mrb[0].mxu0 %v692
        %v764 = vpop.f32.mrb[0].mxu0
        %v765 = vadd.f32 %v697, %v764
        %v766 = vpop.f32.mrb[0].mxu0
        %767 = vdwg.mxu0
        %768 = vst [vmem:[%s696] sm:$0xff] %v765
        %s769 = scalar_lea.vmem %s308, 32 [#allocation11]
        %v770 = vld [vmem:[%s769] sm:$0xff]
        %771 = vmatprep.subr.mxu0 0.0
        %772 = vmatpush1.msra.mxu0 %v461
        %773 = vmatprep.subr.mxu0 0.0
        %774 = vmatpush1.msra.mxu0 %v462
        %775 = vmatprep.subr.mxu0 0.0
        %776 = vmatpush1.msra.mxu0 %v463
        %777 = vmatprep.subr.mxu0 0.0
        %778 = vmatpush1.msra.mxu0 %v464
        %779 = vmatprep.subr.mxu0 0.0
        %780 = vmatpush1.msra.mxu0 %v465
        %781 = vmatprep.subr.mxu0 0.0
        %782 = vmatpush1.msra.mxu0 %v466
        %783 = vmatprep.subr.mxu0 0.0
        %784 = vmatpush1.msra.mxu0 %v467
        %785 = vmatprep.subr.mxu0 0.0
        %786 = vmatpush1.msra.mxu0 %v468
        %787 = vmatprep.subr.mxu0 0.0
        %788 = vmatpush1.msra.mxu0 %v469
        %789 = vmatprep.subr.mxu0 0.0
        %790 = vmatpush1.msra.mxu0 %v470
        %791 = vmatprep.subr.mxu0 0.0
        %792 = vmatpush1.msra.mxu0 %v471
        %793 = vmatprep.subr.mxu0 0.0
        %794 = vmatpush1.msra.mxu0 %v472
        %795 = vmatprep.subr.mxu0 0.0
        %796 = vmatpush1.msra.mxu0 %v473
        %797 = vmatprep.subr.mxu0 0.0
        %798 = vmatpush1.msra.mxu0 %v474
        %799 = vmatprep.subr.mxu0 0.0
        %800 = vmatpush1.msra.mxu0 %v475
        %801 = vmatprep.subr.mxu0 0.0
        %802 = vmatpush1.msra.mxu0 %v476
        %803 = vmatprep.subr.mxu0 0.0
        %804 = vmatpush1.msra.mxu0 0.0
        %805 = vmatprep.subr.mxu0 0.0
        %806 = vmatpush1.msra.mxu0 0.0
        %807 = vmatprep.subr.mxu0 0.0
        %808 = vmatpush1.msra.mxu0 0.0
        %809 = vmatprep.subr.mxu0 0.0
        %810 = vmatpush1.msra.mxu0 0.0
        %811 = vmatprep.subr.mxu0 0.0
        %812 = vmatpush1.msra.mxu0 0.0
        %813 = vmatprep.subr.mxu0 0.0
        %814 = vmatpush1.msra.mxu0 0.0
        %815 = vmatprep.subr.mxu0 0.0
        %816 = vmatpush1.msra.mxu0 0.0
        %817 = vmatprep.subr.mxu0 0.0
        %818 = vmatpush1.msra.mxu0 0.0
        %819 = vmatprep.subr.mxu0 0.0
        %820 = vmatpush1.msra.mxu0 0.0
        %821 = vmatprep.subr.mxu0 0.0
        %822 = vmatpush1.msra.mxu0 0.0
        %823 = vmatprep.subr.mxu0 0.0
        %824 = vmatpush1.msra.mxu0 0.0
        %825 = vmatprep.subr.mxu0 0.0
        %826 = vmatpush1.msra.mxu0 0.0
        %827 = vmatprep.subr.mxu0 0.0
        %828 = vmatpush1.msra.mxu0 0.0
        %829 = vmatprep.subr.mxu0 0.0
        %830 = vmatpush1.msra.mxu0 0.0
        %831 = vmatprep.subr.mxu0 0.0
        %832 = vmatpush1.msra.mxu0 0.0
        %833 = vmatprep.subr.mxu0 0.0
        %834 = vmatpush1.msra.mxu0 0.0
        %835 = vmatprep.mubr.f32.mxu0 0.0
        %836 = vmatmul.mubr.f32.gmra.mrb[0].mxu0 %v765
        %v837 = vpop.f32.mrb[0].mxu0
        %v838 = vadd.f32 %v770, %v837
        %v839 = vpop.f32.mrb[0].mxu0
        %840 = vdwg.mxu0
        %841 = vst [vmem:[%s769] sm:$0xff] %v838
        %s842 = scalar_lea.vmem %s308, 40 [#allocation11]
        %v843 = vld [vmem:[%s842] sm:$0xff]
        %844 = vmatprep.subr.mxu0 0.0
        %845 = vmatpush1.msra.mxu0 %v461
        %846 = vmatprep.subr.mxu0 0.0
        %847 = vmatpush1.msra.mxu0 %v462
        %848 = vmatprep.subr.mxu0 0.0
        %849 = vmatpush1.msra.mxu0 %v463
        %850 = vmatprep.subr.mxu0 0.0
        %851 = vmatpush1.msra.mxu0 %v464
        %852 = vmatprep.subr.mxu0 0.0
        %853 = vmatpush1.msra.mxu0 %v465
        %854 = vmatprep.subr.mxu0 0.0
        %855 = vmatpush1.msra.mxu0 %v466
        %856 = vmatprep.subr.mxu0 0.0
        %857 = vmatpush1.msra.mxu0 %v467
        %858 = vmatprep.subr.mxu0 0.0
        %859 = vmatpush1.msra.mxu0 %v468
        %860 = vmatprep.subr.mxu0 0.0
        %861 = vmatpush1.msra.mxu0 %v469
        %862 = vmatprep.subr.mxu0 0.0
        %863 = vmatpush1.msra.mxu0 %v470
        %864 = vmatprep.subr.mxu0 0.0
        %865 = vmatpush1.msra.mxu0 %v471
        %866 = vmatprep.subr.mxu0 0.0
        %867 = vmatpush1.msra.mxu0 %v472
        %868 = vmatprep.subr.mxu0 0.0
        %869 = vmatpush1.msra.mxu0 %v473
        %870 = vmatprep.subr.mxu0 0.0
        %871 = vmatpush1.msra.mxu0 %v474
        %872 = vmatprep.subr.mxu0 0.0
        %873 = vmatpush1.msra.mxu0 %v475
        %874 = vmatprep.subr.mxu0 0.0
        %875 = vmatpush1.msra.mxu0 %v476
        %876 = vmatprep.subr.mxu0 0.0
        %877 = vmatpush1.msra.mxu0 0.0
        %878 = vmatprep.subr.mxu0 0.0
        %879 = vmatpush1.msra.mxu0 0.0
        %880 = vmatprep.subr.mxu0 0.0
        %881 = vmatpush1.msra.mxu0 0.0
        %882 = vmatprep.subr.mxu0 0.0
        %883 = vmatpush1.msra.mxu0 0.0
        %884 = vmatprep.subr.mxu0 0.0
        %885 = vmatpush1.msra.mxu0 0.0
        %886 = vmatprep.subr.mxu0 0.0
        %887 = vmatpush1.msra.mxu0 0.0
        %888 = vmatprep.subr.mxu0 0.0
        %889 = vmatpush1.msra.mxu0 0.0
        %890 = vmatprep.subr.mxu0 0.0
        %891 = vmatpush1.msra.mxu0 0.0
        %892 = vmatprep.subr.mxu0 0.0
        %893 = vmatpush1.msra.mxu0 0.0
        %894 = vmatprep.subr.mxu0 0.0
        %895 = vmatpush1.msra.mxu0 0.0
        %896 = vmatprep.subr.mxu0 0.0
        %897 = vmatpush1.msra.mxu0 0.0
        %898 = vmatprep.subr.mxu0 0.0
        %899 = vmatpush1.msra.mxu0 0.0
        %900 = vmatprep.subr.mxu0 0.0
        %901 = vmatpush1.msra.mxu0 0.0
        %902 = vmatprep.subr.mxu0 0.0
        %903 = vmatpush1.msra.mxu0 0.0
        %904 = vmatprep.subr.mxu0 0.0
        %905 = vmatpush1.msra.mxu0 0.0
        %906 = vmatprep.subr.mxu0 0.0
        %907 = vmatpush1.msra.mxu0 0.0
        %908 = vmatprep.mubr.f32.mxu0 0.0
        %909 = vmatmul.mubr.f32.gmra.mrb[0].mxu0 %v838
        %v910 = vpop.f32.mrb[0].mxu0
        %v911 = vadd.f32 %v843, %v910
        %v912 = vpop.f32.mrb[0].mxu0
        %913 = vdwg.mxu0
        %914 = vst [vmem:[%s842] sm:$0xff] %v911
        %s915 = scalar_lea.vmem %s308, 48 [#allocation11]
        %v916 = vld [vmem:[%s915] sm:$0xff]
        %917 = vmatprep.subr.mxu0 0.0
        %918 = vmatpush1.msra.mxu0 %v461
        %919 = vmatprep.subr.mxu0 0.0
        %920 = vmatpush1.msra.mxu0 %v462
        %921 = vmatprep.subr.mxu0 0.0
        %922 = vmatpush1.msra.mxu0 %v463
        %923 = vmatprep.subr.mxu0 0.0
        %924 = vmatpush1.msra.mxu0 %v464
        %925 = vmatprep.subr.mxu0 0.0
        %926 = vmatpush1.msra.mxu0 %v465
        %927 = vmatprep.subr.mxu0 0.0
        %928 = vmatpush1.msra.mxu0 %v466
        %929 = vmatprep.subr.mxu0 0.0
        %930 = vmatpush1.msra.mxu0 %v467
        %931 = vmatprep.subr.mxu0 0.0
        %932 = vmatpush1.msra.mxu0 %v468
        %933 = vmatprep.subr.mxu0 0.0
        %934 = vmatpush1.msra.mxu0 %v469
        %935 = vmatprep.subr.mxu0 0.0
        %936 = vmatpush1.msra.mxu0 %v470
        %937 = vmatprep.subr.mxu0 0.0
        %938 = vmatpush1.msra.mxu0 %v471
        %939 = vmatprep.subr.mxu0 0.0
        %940 = vmatpush1.msra.mxu0 %v472
        %941 = vmatprep.subr.mxu0 0.0
        %942 = vmatpush1.msra.mxu0 %v473
        %943 = vmatprep.subr.mxu0 0.0
        %944 = vmatpush1.msra.mxu0 %v474
        %945 = vmatprep.subr.mxu0 0.0
        %946 = vmatpush1.msra.mxu0 %v475
        %947 = vmatprep.subr.mxu0 0.0
        %948 = vmatpush1.msra.mxu0 %v476
        %949 = vmatprep.subr.mxu0 0.0
        %950 = vmatpush1.msra.mxu0 0.0
        %951 = vmatprep.subr.mxu0 0.0
        %952 = vmatpush1.msra.mxu0 0.0
        %953 = vmatprep.subr.mxu0 0.0
        %954 = vmatpush1.msra.mxu0 0.0
        %955 = vmatprep.subr.mxu0 0.0
        %956 = vmatpush1.msra.mxu0 0.0
        %957 = vmatprep.subr.mxu0 0.0
        %958 = vmatpush1.msra.mxu0 0.0
        %959 = vmatprep.subr.mxu0 0.0
        %960 = vmatpush1.msra.mxu0 0.0
        %961 = vmatprep.subr.mxu0 0.0
        %962 = vmatpush1.msra.mxu0 0.0
        %963 = vmatprep.subr.mxu0 0.0
        %964 = vmatpush1.msra.mxu0 0.0
        %965 = vmatprep.subr.mxu0 0.0
        %966 = vmatpush1.msra.mxu0 0.0
        %967 = vmatprep.subr.mxu0 0.0
        %968 = vmatpush1.msra.mxu0 0.0
        %969 = vmatprep.subr.mxu0 0.0
        %970 = vmatpush1.msra.mxu0 0.0
        %971 = vmatprep.subr.mxu0 0.0
        %972 = vmatpush1.msra.mxu0 0.0
        %973 = vmatprep.subr.mxu0 0.0
        %974 = vmatpush1.msra.mxu0 0.0
        %975 = vmatprep.subr.mxu0 0.0
        %976 = vmatpush1.msra.mxu0 0.0
        %977 = vmatprep.subr.mxu0 0.0
        %978 = vmatpush1.msra.mxu0 0.0
        %979 = vmatprep.subr.mxu0 0.0
        %980 = vmatpush1.msra.mxu0 0.0
        %981 = vmatprep.mubr.f32.mxu0 0.0
        %982 = vmatmul.mubr.f32.gmra.mrb[0].mxu0 %v911
        %v983 = vpop.f32.mrb[0].mxu0
        %v984 = vadd.f32 %v916, %v983
        %v985 = vpop.f32.mrb[0].mxu0
        %986 = vdwg.mxu0
        %987 = vst [vmem:[%s915] sm:$0xff] %v984
        %s988 = scalar_lea.vmem %s308, 56 [#allocation11]
        %v989 = vld [vmem:[%s988] sm:$0xff]
        %990 = vmatprep.subr.mxu0 0.0
        %991 = vmatpush1.msra.mxu0 %v461
        %992 = vmatprep.subr.mxu0 0.0
        %993 = vmatpush1.msra.mxu0 %v462
        %994 = vmatprep.subr.mxu0 0.0
        %995 = vmatpush1.msra.mxu0 %v463
        %996 = vmatprep.subr.mxu0 0.0
        %997 = vmatpush1.msra.mxu0 %v464
        %998 = vmatprep.subr.mxu0 0.0
        %999 = vmatpush1.msra.mxu0 %v465
        %1000 = vmatprep.subr.mxu0 0.0
        %1001 = vmatpush1.msra.mxu0 %v466
        %1002 = vmatprep.subr.mxu0 0.0
        %1003 = vmatpush1.msra.mxu0 %v467
        %1004 = vmatprep.subr.mxu0 0.0
        %1005 = vmatpush1.msra.mxu0 %v468
        %1006 = vmatprep.subr.mxu0 0.0
        %1007 = vmatpush1.msra.mxu0 %v469
        %1008 = vmatprep.subr.mxu0 0.0
        %1009 = vmatpush1.msra.mxu0 %v470
        %1010 = vmatprep.subr.mxu0 0.0
        %1011 = vmatpush1.msra.mxu0 %v471
        %1012 = vmatprep.subr.mxu0 0.0
        %1013 = vmatpush1.msra.mxu0 %v472
        %1014 = vmatprep.subr.mxu0 0.0
        %1015 = vmatpush1.msra.mxu0 %v473
        %1016 = vmatprep.subr.mxu0 0.0
        %1017 = vmatpush1.msra.mxu0 %v474
        %1018 = vmatprep.subr.mxu0 0.0
        %1019 = vmatpush1.msra.mxu0 %v475
        %1020 = vmatprep.subr.mxu0 0.0
        %1021 = vmatpush1.msra.mxu0 %v476
        %1022 = vmatprep.subr.mxu0 0.0
        %1023 = vmatpush1.msra.mxu0 0.0
        %1024 = vmatprep.subr.mxu0 0.0
        %1025 = vmatpush1.msra.mxu0 0.0
        %1026 = vmatprep.subr.mxu0 0.0
        %1027 = vmatpush1.msra.mxu0 0.0
        %1028 = vmatprep.subr.mxu0 0.0
        %1029 = vmatpush1.msra.mxu0 0.0
        %1030 = vmatprep.subr.mxu0 0.0
        %1031 = vmatpush1.msra.mxu0 0.0
        %1032 = vmatprep.subr.mxu0 0.0
        %1033 = vmatpush1.msra.mxu0 0.0
        %1034 = vmatprep.subr.mxu0 0.0
        %1035 = vmatpush1.msra.mxu0 0.0
        %1036 = vmatprep.subr.mxu0 0.0
        %1037 = vmatpush1.msra.mxu0 0.0
        %1038 = vmatprep.subr.mxu0 0.0
        %1039 = vmatpush1.msra.mxu0 0.0
        %1040 = vmatprep.subr.mxu0 0.0
        %1041 = vmatpush1.msra.mxu0 0.0
        %1042 = vmatprep.subr.mxu0 0.0
        %1043 = vmatpush1.msra.mxu0 0.0
        %1044 = vmatprep.subr.mxu0 0.0
        %1045 = vmatpush1.msra.mxu0 0.0
        %1046 = vmatprep.subr.mxu0 0.0
        %1047 = vmatpush1.msra.mxu0 0.0
        %1048 = vmatprep.subr.mxu0 0.0
        %1049 = vmatpush1.msra.mxu0 0.0
        %1050 = vmatprep.subr.mxu0 0.0
        %1051 = vmatpush1.msra.mxu0 0.0
        %1052 = vmatprep.subr.mxu0 0.0
        %1053 = vmatpush1.msra.mxu0 0.0
        %1054 = vmatprep.mubr.f32.mxu0 0.0
        %1055 = vmatmul.mubr.f32.gmra.mrb[0].mxu0 %v984
        %v1056 = vpop.f32.mrb[0].mxu0
        %v1057 = vadd.f32 %v989, %v1056
        %v1058 = vpop.f32.mrb[0].mxu0
        %1059 = vdwg.mxu0
        %1060 = vst [vmem:[%s988] sm:$0xff] %v1057
        %1061 = vst [vmem:[#allocation2] sm:$0xff] %v1057
        %s1062 = sand.u32 %s163, 1
        %s1063 = scalar_lea.sflag [#allocation5], %s1062
        %s1064 = sand.u32 %s163, 1
        %s1065 = smul.addr %s1064, 64
        %s1066 = scalar_lea.vmem [#allocation11], %s1065
        // Predicated region
        $region61: #{tpu_custom_call.1} parent=39 // pred_check
          %p1067 = pneg %p173
        $region62: #{tpu_custom_call.1} parent=39 // pred_check_branch
          %1069 = sbr.rel (%p1067) target = $region64
        $region63: #{tpu_custom_call.1} parent=39 // pred_region
          %s1070 = smul.u32 8, %s29
          %s1072 = ssub.s32 1024, 1024
          %1073 = vsyncadd %s1063, %s1072
          %s1074 = sadd.s32 %s28, %s1070
          %s1075 = smul.addr %s1074, 128
          %s1076 = scalar_lea.hbm %s5, %s1075
          %s1077 = sshll.u32 %s1066, 4
          %s1078 = int_to_ptr.vmem [resolvable:$true] %s1077
          %1083 = dma.vmem_to_hbm [thread:$0]  %s1078, 1024, %s1076, %s1063, 128, 128, 8
        $region64: #{tpu_custom_call.1} parent=39 // pred_fallthru
          _
      $region40: #{tpu_custom_call.1} parent=5 // pred_fallthru
        _
      %p1084 = scmp.le.s32.totalorder 2, %s19
      // Predicated region
      $region65: #{tpu_custom_call.1} parent=5 // pred_check
        %p1085 = pneg %p1084
      $region66: #{tpu_custom_call.1} parent=5 // pred_check_branch
        %1087 = sbr.rel (%p1085) target = $region68
      $region67: #{tpu_custom_call.1} parent=5 // pred_region
        %s1088 = ssub.s32 %s19, 2
        // Predicated region
        $region69: #{tpu_custom_call.1} parent=67 // pred_check
          %p1089 = pneg %p179
        $region70: #{tpu_custom_call.1} parent=67 // pred_check_branch
          %1091 = sbr.rel (%p1089) target = $region72
        $region71: #{tpu_custom_call.1} parent=67 // pred_region
          %s1092 = sand.u32 %s164, 1
          %s1093 = scalar_lea.sflag [#allocation5], %s1092
          %s1094 = sand.u32 %s164, 1
          %s1095 = smul.addr %s1094, 64
          %s1096 = scalar_lea.vmem [#allocation11], %s1095
          %1097 = dma.done %s1093, 1024
        $region72: #{tpu_custom_call.1} parent=67 // pred_fallthru
          _
      $region68: #{tpu_custom_call.1} parent=5 // pred_fallthru
        _
    $region6: #{tpu_custom_call.1} parent=1 // loop_footer
      %s23 = sadd.s32 1, %s19
    $region7: #{tpu_custom_call.1} parent=1 // loop_footer_branch
      %18 = sbr.rel target = $region3
    $region8: #{tpu_custom_call.1} parent=1 // loop_exit
      _
    %1098 = vsyncpa [#allocation4], 1
    %s1099 = scalar_lea.sflag [#allocation4], 1
    %1100 = vsyncpa %s1099, 1
    %1101 = vsyncpa [#allocation7], 1
    %1102 = vsyncpa [#allocation10], 1
    %1103 = vsyncpa [#allocation5], 1
    %s1104 = scalar_lea.sflag [#allocation5], 1
    %1105 = vsyncpa %s1104, 1

</llo_original>
